<compile_context>
chip_gen: v7x
topology: tpu7x:2x2x1
jax: 0.10.0
libtpu: 0.0.40
codegen_flags: <defaults>
</compile_context>

<pallas_src>
import math

import jax
import jax.numpy as jnp
from jax.experimental import pallas as pl
from jax.experimental.pallas import tpu as pltpu


def _round_up(x, m):
    return ((x + m - 1) // m) * m


def _cdiv(a, b):
    return (a + b - 1) // b


def _vmem_budget_bytes():
    """~85% of physical VMEM (generation aware); conservative fallback = 64 MiB (v7x)."""
    try:
        cap = int(pltpu.get_tpu_info().vmem_capacity_bytes)
    except Exception:
        cap = 64 * 1024 * 1024
    return int(0.85 * cap)


# --------------------------------------------------------------------------
# Kernels
# --------------------------------------------------------------------------
def _ffn_kernel_resident(x_ref, w1_ref, b1_ref, w2_ref, b2_ref, o_ref):
    """Full weights stay VMEM-resident; one grid axis over token tiles."""
    h = jnp.dot(x_ref[...], w1_ref[...], preferred_element_type=jnp.float32)
    h = jnp.maximum(h + b1_ref[...], 0.0)                    # bias + ReLU in f32 (VPU)
    y = jnp.dot(h.astype(w2_ref.dtype), w2_ref[...],
                preferred_element_type=jnp.float32)
    o_ref[...] = (y + b2_ref[...]).astype(o_ref.dtype)


def _ffn_kernel_ktiled(x_ref, w1_ref, b1_ref, w2_ref, b2_ref, o_ref, acc_ref):
    """d_ff tiled along inner 'arbitrary' axis; f32 accumulation in VMEM scratch."""
    k = pl.program_id(1)

    h = jnp.dot(x_ref[...], w1_ref[...], preferred_element_type=jnp.float32)
    h = jnp.maximum(h + b1_ref[...], 0.0)
    partial = jnp.dot(h.astype(w2_ref.dtype), w2_ref[...],
                      preferred_element_type=jnp.float32)

    @pl.when(k == 0)
    def _():
        # First slab: write directly (plus b2) — saves a zero-store + load.
        acc_ref[...] = partial + b2_ref[...]

    @pl.when(k > 0)
    def _():
        acc_ref[...] += partial

    @pl.when(k == pl.num_programs(1) - 1)
    def _():
        o_ref[...] = acc_ref[...].astype(o_ref.dtype)


# --------------------------------------------------------------------------
# Wrapper
# --------------------------------------------------------------------------
def prepare_ffn_params(w1, b1, w2, b2, compute_dtype=jnp.bfloat16):
    """Cast weights to the MXU compute dtype and zero-pad to 128-aligned shapes
    ONCE, outside the per-call hot path. Keep the returned dict persistent."""
    d_model, d_ff = w1.shape
    d_model_p = _round_up(d_model, 128)
    d_ff_p = _round_up(d_ff, 128)
    w1c = jnp.pad(w1.astype(compute_dtype),
                  ((0, d_model_p - d_model), (0, d_ff_p - d_ff)))
    w2c = jnp.pad(w2.astype(compute_dtype),
                  ((0, d_ff_p - d_ff), (0, d_model_p - d_model)))
    b1f = jnp.pad(b1.astype(jnp.float32).reshape(1, d_ff),
                  ((0, 0), (0, d_ff_p - d_ff)))
    b2f = jnp.pad(b2.astype(jnp.float32).reshape(1, d_model),
                  ((0, 0), (0, d_model_p - d_model)))
    return dict(w1=w1c, b1=b1f, w2=w2c, b2=b2f,
                d_model=d_model, d_ff=d_ff, compute_dtype=compute_dtype)


def position_wise_feed_forward(x, params, *, max_tile_m=1024, max_tile_ff=2048,
                               force_variant=None):
    """x: (B, S, d_model); params from prepare_ffn_params. Returns (B, S, d_model)."""
    d_model, d_ff = params["d_model"], params["d_ff"]
    compute_dtype = params["compute_dtype"]
    w1c, b1f, w2c, b2f = params["w1"], params["b1"], params["w2"], params["b2"]
    d_model_p, d_ff_p = w1c.shape

    B, S, _ = x.shape
    tokens = B * S
    out_dtype = x.dtype
    cb = jnp.dtype(compute_dtype).itemsize
    ob = jnp.dtype(out_dtype).itemsize

    tokens_p8 = _round_up(tokens, 8)
    budget = _vmem_budget_bytes()
    slack = 2 * 1024 * 1024                       # Mosaic internal scratch headroom

    # ---- can the full bf16 weights stay VMEM-resident (no k axis)? ----
    weights_fixed = 2 * 2 * d_model_p * d_ff_p * cb          # W1+W2, double-buffered
    bias_fixed = 2 * 8 * (d_ff_p + d_model_p) * 4            # biases (8-sublane padded)
    resident_ok = (weights_fixed + bias_fixed + slack) <= budget // 2
    if force_variant == "resident":
        resident_ok = True
    elif force_variant == "ktiled":
        resident_ok = False

    def pick_tile_m(per_row_bytes, fixed_bytes):
        avail = max(budget - fixed_bytes, 8 * per_row_bytes)
        t = max(8, (avail // per_row_bytes) // 8 * 8)
        t = min(t, max_tile_m, tokens_p8)
        # Megacore (v7x has 2 TCs): aim for >= 2 m tiles when there are enough rows.
        n_m = _cdiv(tokens_p8, t)
        if n_m == 1 and tokens_p8 >= 16:
            n_m = 2
        return _round_up(_cdiv(tokens_p8, n_m), 8)

    if resident_ok:
        per_row = (2 * d_model_p * cb             # x tiles (double-buffered)
                   + 2 * d_model_p * ob           # out tiles
                   + d_ff_p * 4                   # f32 fc1 intermediate
                   + d_ff_p * cb)                 # bf16 cast of h fed to fc2
        tile_m = pick_tile_m(per_row, weights_fixed + bias_fixed + slack)
        tile_ff = d_ff_p
        num_k = 1
    else:
        # tile_ff: largest 128-multiple divisor of d_ff_p that fits the slab budget
        # (divisor => zero padding waste along d_ff).
        slab_budget = budget // 3
        q = d_ff_p // 128
        tile_ff = 128
        for d in range(1, q + 1):
            if q % d == 0:
                cand = 128 * d
                if cand <= max_tile_ff and 4 * d_model_p * cand * cb <= slab_budget:
                    tile_ff = cand
        num_k = d_ff_p // tile_ff
        fixed = (4 * d_model_p * tile_ff * cb                 # W1/W2 slabs, dbl-buffered
                 + 2 * 8 * (tile_ff + d_model_p) * 4          # bias slabs
                 + slack)
        per_row = (2 * d_model_p * cb             # x tiles
                   + 2 * d_model_p * ob           # out tiles
                   + d_model_p * 4                # f32 accumulator scratch
                   + tile_ff * 4                  # f32 fc1 intermediate
                   + tile_ff * cb)                # bf16 cast of h
        tile_m = pick_tile_m(per_row, fixed)

    tokens_p = _round_up(tokens, tile_m)
    num_m = tokens_p // tile_m

    # Per-call activation prep (cheap relative to weights).
    x2d = x.reshape(tokens, d_model).astype(compute_dtype)
    x2d = jnp.pad(x2d, ((0, tokens_p - tokens), (0, d_model_p - d_model)))

    vmem_limit = int(min(budget, 128 * 1024 * 1024))

    if resident_ok:
        out2d = pl.pallas_call(
            _ffn_kernel_resident,
            out_shape=jax.ShapeDtypeStruct((tokens_p, d_model_p), out_dtype),
            grid_spec=pltpu.PrefetchScalarGridSpec(
                num_scalar_prefetch=0,
                grid=(num_m,),
                in_specs=[
                    pl.BlockSpec((tile_m, d_model_p), lambda m: (m, 0)),    # x tile
                    pl.BlockSpec((d_model_p, d_ff_p), lambda m: (0, 0)),    # W1 (resident)
                    pl.BlockSpec((1, d_ff_p), lambda m: (0, 0)),            # b1
                    pl.BlockSpec((d_ff_p, d_model_p), lambda m: (0, 0)),    # W2 (resident)
                    pl.BlockSpec((1, d_model_p), lambda m: (0, 0)),         # b2
                ],
                out_specs=pl.BlockSpec((tile_m, d_model_p), lambda m: (m, 0)),
            ),
            compiler_params=pltpu.CompilerParams(
                dimension_semantics=("parallel",),
                vmem_limit_bytes=vmem_limit),
        )(x2d, w1c, b1f, w2c, b2f)
    else:
        out2d = pl.pallas_call(
            _ffn_kernel_ktiled,
            out_shape=jax.ShapeDtypeStruct((tokens_p, d_model_p), out_dtype),
            grid_spec=pltpu.PrefetchScalarGridSpec(
                num_scalar_prefetch=0,
                grid=(num_m, num_k),
                in_specs=[
                    pl.BlockSpec((tile_m, d_model_p), lambda m, k: (m, 0)),   # x tile
                    pl.BlockSpec((d_model_p, tile_ff), lambda m, k: (0, k)),  # W1 slab
                    pl.BlockSpec((1, tile_ff), lambda m, k: (0, k)),          # b1 slab
                    pl.BlockSpec((tile_ff, d_model_p), lambda m, k: (k, 0)),  # W2 slab
                    pl.BlockSpec((1, d_model_p), lambda m, k: (0, 0)),        # b2
                ],
                out_specs=pl.BlockSpec((tile_m, d_model_p), lambda m, k: (m, 0)),
                scratch_shapes=[pltpu.VMEM((tile_m, d_model_p), jnp.float32)],
            ),
            compiler_params=pltpu.CompilerParams(
                dimension_semantics=("parallel", "arbitrary"),
                vmem_limit_bytes=vmem_limit),
        )(x2d, w1c, b1f, w2c, b2f)

    return out2d[:tokens, :d_model].reshape(B, S, d_model)


def init_params(key, d_model, d_ff, dtype=jnp.float32):
    """Mimics nn.Linear defaults (uniform +-1/sqrt(fan_in)); weights stored
    transposed relative to PyTorch's (out, in) layout."""
    k1, k2, k3, k4 = jax.random.split(key, 4)
    bound1 = 1.0 / math.sqrt(d_model)
    bound2 = 1.0 / math.sqrt(d_ff)
    w1 = jax.random.uniform(k1, (d_model, d_ff), dtype, -bound1, bound1)
    b1 = jax.random.uniform(k2, (d_ff,), dtype, -bound1, bound1)
    w2 = jax.random.uniform(k3, (d_ff, d_model), dtype, -bound2, bound2)
    b2 = jax.random.uniform(k4, (d_model,), dtype, -bound2, bound2)
    return w1, b1, w2, b2


if __name__ == "__main__":
    # Small but non-trivial shapes: 300 tokens -> two 152-row tiles (no dead
    # rows, 2-wide parallel axis for megacore); d_ff=768 divides cleanly.
    B, S, d_model, d_ff = 3, 100, 128, 768

    key = jax.random.PRNGKey(0)
    kx, kp = jax.random.split(key)
    x = jax.random.normal(kx, (B, S, d_model), dtype=jnp.float32)
    w1, b1, w2, b2 = init_params(kp, d_model, d_ff)

    # Prepare (cast + pad) weights once, outside the hot path.
    params = prepare_ffn_params(w1, b1, w2, b2)

    # Reference mimicking the kernel's bf16-operand / f32-accumulate math.
    xb = x.astype(jnp.bfloat16).astype(jnp.float32)
    w1b = w1.astype(jnp.bfloat16).astype(jnp.float32)
    w2b = w2.astype(jnp.bfloat16).astype(jnp.float32)
    h = jnp.maximum(xb @ w1b + b1, 0.0)
    ref = h.astype(jnp.bfloat16).astype(jnp.float32) @ w2b + b2

    # 1) Auto-selected variant (weights fit VMEM here -> resident path).
    out = jax.block_until_ready(position_wise_feed_forward(x, params))
    assert out.shape == (B, S, d_model) and out.dtype == x.dtype
    assert jnp.allclose(out, ref, atol=1e-2, rtol=1e-2), \
        float(jnp.max(jnp.abs(out - ref)))

    # 2) Force the k-tiled accumulation path (tile_ff=384 -> 2 k-steps) to
    #    exercise the large-d_ff code path as well.
    out_k = jax.block_until_ready(
        position_wise_feed_forward(x, params, force_variant="ktiled",
                                   max_tile_ff=384))
    assert jnp.allclose(out_k, ref, atol=1e-2, rtol=1e-2), \
        float(jnp.max(jnp.abs(out_k - ref)))

    print("KERNEL_OK")
</pallas_src>

<mosaic_0001>
module attributes {stable_mosaic.version = 11 : i64} {
  func.func @_ffn_kernel_resident(%arg0: i32, %arg1: memref<152x128xbf16, #tpu.memory_space<vmem>>, %arg2: memref<128x768xbf16, #tpu.memory_space<vmem>>, %arg3: memref<1x768xf32, #tpu.memory_space<vmem>>, %arg4: memref<768x128xbf16, #tpu.memory_space<vmem>>, %arg5: memref<1x128xf32, #tpu.memory_space<vmem>>, %arg6: memref<152x128xf32, #tpu.memory_space<vmem>>) attributes {dimension_semantics = [#tpu.dimension_semantics<parallel>], iteration_bounds = array<i64: 2>, scalar_prefetch = 0 : i64, scratch_operands = 0 : i64, tpu.core_type = #tpu.core_type<tc>, window_params = [{transform_indices = @transform_0, window_bounds = array<i64: 152, 128>}, {pipeline_mode = #tpu.pipeline_mode<synchronous>, transform_indices = @transform_1, window_bounds = array<i64: 128, 768>}, {pipeline_mode = #tpu.pipeline_mode<synchronous>, transform_indices = @transform_2, window_bounds = array<i64: 1, 768>}, {pipeline_mode = #tpu.pipeline_mode<synchronous>, transform_indices = @transform_3, window_bounds = array<i64: 768, 128>}, {pipeline_mode = #tpu.pipeline_mode<synchronous>, transform_indices = @transform_4, window_bounds = array<i64: 1, 128>}, {transform_indices = @transform_5, window_bounds = array<i64: 152, 128>}]} {
    %c0 = arith.constant 0 : index
    %c0_0 = arith.constant 0 : index
    %0 = vector.load %arg1[%c0, %c0_0] : memref<152x128xbf16, #tpu.memory_space<vmem>>, vector<152x128xbf16>
    %c0_1 = arith.constant 0 : index
    %c0_2 = arith.constant 0 : index
    %1 = vector.load %arg2[%c0_1, %c0_2] : memref<128x768xbf16, #tpu.memory_space<vmem>>, vector<128x768xbf16>
    %cst = arith.constant dense<0.000000e+00> : vector<152x768xf32>
    %2 = tpu.matmul %0, %1, %cst {dimension_numbers = #tpu.dot_dimension_numbers<[1], [0], [0], [1], [0, 0, 1, 1], [], []>} : vector<152x128xbf16>, vector<128x768xbf16>, vector<152x768xf32> -> vector<152x768xf32>
    %c0_3 = arith.constant 0 : index
    %c0_4 = arith.constant 0 : index
    %3 = vector.load %arg3[%c0_3, %c0_4] : memref<1x768xf32, #tpu.memory_space<vmem>>, vector<1x768xf32>
    %4 = vector.broadcast %3 : vector<1x768xf32> to vector<152x768xf32>
    %5 = arith.addf %2, %4 : vector<152x768xf32>
    %cst_5 = arith.constant 0.000000e+00 : f32
    %6 = vector.broadcast %cst_5 : f32 to vector<152x768xf32>
    %7 = arith.maximumf %5, %6 : vector<152x768xf32>
    %8 = arith.truncf %7 : vector<152x768xf32> to vector<152x768xbf16>
    %c0_6 = arith.constant 0 : index
    %c0_7 = arith.constant 0 : index
    %9 = vector.load %arg4[%c0_6, %c0_7] : memref<768x128xbf16, #tpu.memory_space<vmem>>, vector<768x128xbf16>
    %cst_8 = arith.constant dense<0.000000e+00> : vector<152x128xf32>
    %10 = tpu.matmul %8, %9, %cst_8 {dimension_numbers = #tpu.dot_dimension_numbers<[1], [0], [0], [1], [0, 0, 1, 1], [], []>} : vector<152x768xbf16>, vector<768x128xbf16>, vector<152x128xf32> -> vector<152x128xf32>
    %c0_9 = arith.constant 0 : index
    %c0_10 = arith.constant 0 : index
    %11 = vector.load %arg5[%c0_9, %c0_10] : memref<1x128xf32, #tpu.memory_space<vmem>>, vector<1x128xf32>
    %12 = vector.broadcast %11 : vector<1x128xf32> to vector<152x128xf32>
    %13 = arith.addf %10, %12 : vector<152x128xf32>
    %c0_11 = arith.constant 0 : index
    %c0_12 = arith.constant 0 : index
    %14 = vector.load %arg6[%c0_11, %c0_12] : memref<152x128xf32, #tpu.memory_space<vmem>>, vector<152x128xf32>
    tpu.vector_store %arg6[%c0_11, %c0_12], %13 {strides = array<i32>} : memref<152x128xf32, #tpu.memory_space<vmem>>, vector<152x128xf32>,
    return
  }
  func.func @transform_0(%arg0: i32) -> (i32, i32) {
    %c0_i32 = arith.constant 0 : i32
    %c0_i32_0 = arith.constant 0 : i32
    return %arg0, %c0_i32 : i32, i32
  }
  func.func @transform_1(%arg0: i32) -> (i32, i32) {
    %c0_i32 = arith.constant 0 : i32
    %c0_i32_0 = arith.constant 0 : i32
    %c0_i32_1 = arith.constant 0 : i32
    return %c0_i32, %c0_i32_0 : i32, i32
  }
  func.func @transform_2(%arg0: i32) -> (i32, i32) {
    %c0_i32 = arith.constant 0 : i32
    %c0_i32_0 = arith.constant 0 : i32
    %c0_i32_1 = arith.constant 0 : i32
    return %c0_i32, %c0_i32_0 : i32, i32
  }
  func.func @transform_3(%arg0: i32) -> (i32, i32) {
    %c0_i32 = arith.constant 0 : i32
    %c0_i32_0 = arith.constant 0 : i32
    %c0_i32_1 = arith.constant 0 : i32
    return %c0_i32, %c0_i32_0 : i32, i32
  }
  func.func @transform_4(%arg0: i32) -> (i32, i32) {
    %c0_i32 = arith.constant 0 : i32
    %c0_i32_0 = arith.constant 0 : i32
    %c0_i32_1 = arith.constant 0 : i32
    return %c0_i32, %c0_i32_0 : i32, i32
  }
  func.func @transform_5(%arg0: i32) -> (i32, i32) {
    %c0_i32 = arith.constant 0 : i32
    %c0_i32_0 = arith.constant 0 : i32
    return %arg0, %c0_i32 : i32, i32
  }
}

</mosaic_0001>

<llo_original>
// kernel: tpu_custom_call.1
$region0: #{tpu_custom_call.1}
  #allocation0 [shape = 'u32[]', space=smem, size = 0x4, offset = 0x4, fixed_abs, tag = 'smem constant byte address 0x4 - core index']
  #allocation1 [shape = 'u32[144,128]{1,0:T(1,128)}', space=vmem, size = 0x12000, scoped, tag = 'internal scratch']
  %s0 = inlined_call_operand.hbm [shape: bf16[304,128], index: 0, kind: input, shape index: {}]
  %s1 = inlined_call_operand.hbm [shape: bf16[128,768], index: 1, kind: input, shape index: {}]
  %s2 = inlined_call_operand.vmem [shape: f32[1,768], index: 2, kind: input, shape index: {}]
  %s3 = inlined_call_operand.hbm [shape: bf16[768,128], index: 3, kind: input, shape index: {}]
  %s4 = inlined_call_operand.vmem [shape: f32[1,128], index: 4, kind: input, shape index: {}]
  %s5 = inlined_call_operand.hbm [shape: f32[304,128], index: 5, kind: output, shape index: {}]
  %s6 = sld [smem:[#allocation0]]
  $region65: #{tpu_custom_call.1} parent=0
    _
  %s8 = ssub.s32 1, %s6
  %s9 = scalar_select 0, %s8, %s6
  $region1: #{tpu_custom_call.1} parent=0
    #allocation2 [shape = 'u8[77824]{0}', space=vmem, size = 0x13000, scoped, tag = 'input window, operand 0']
    #allocation3 [shape = 's32[2]{0}', space=sflag, size = 0x8, scoped, tag = 'scoped memory for tpu_custom_call.1']
    #allocation4 [shape = 's32[2]{0}', space=sflag, size = 0x8, scoped, tag = 'scoped memory for tpu_custom_call.1']
    #allocation5 [shape = 'u8[196608]{0}', space=vmem, size = 0x30000, scoped, tag = 'input window, operand 1, single buffered']
    #allocation6 [shape = 's32[1]{0}', space=sflag, size = 0x4, scoped, tag = 'scoped memory for tpu_custom_call.1']
    #allocation7 [shape = 'u8[196608]{0}', space=vmem, size = 0x30000, scoped, tag = 'input window, operand 3, single buffered']
    #allocation8 [shape = 'u8[155648]{0}', space=vmem, size = 0x26000, scoped, tag = 'output window, operand 0']
    %10 = vsyncpa [#allocation3], 0
    %s11 = scalar_lea.sflag [#allocation3], 1
    %12 = vsyncpa %s11, 0
    %13 = vsyncpa [#allocation6], 0
    %14 = vsyncpa [#allocation4], 0
    %s15 = scalar_lea.sflag [#allocation4], 1
    %16 = vsyncpa %s15, 0
    loop: start=0, step=1, limit=4
    $region2: #{tpu_custom_call.1} parent=1 // loop_pre_header
      _
    $region3: #{tpu_custom_call.1} parent=1 // loop_header
      %s18 = sphi 0, %s22
      %p19 = scmp.ge.s32.totalorder %s18, 4
      %s28 = sphi 0, %s30
      %s31 = sphi 0, %s28
      %s32 = sphi 0, %s31
      %s48 = sphi 0, %s32
      %s52 = sphi 0, %s52
      %s54 = sphi 0, %s52
      %s55 = sphi 0, %s54
      %s69 = sphi 0, %s55
      %s73 = sphi 0, %s73
      %s75 = sphi 0, %s73
      %s76 = sphi 0, %s75
      %s90 = sphi 0, %s76
      %s94 = sphi 0, %s94
      %s96 = sphi 0, %s94
      %s97 = sphi 0, %s96
      %s111 = sphi 0, %s97
      %s115 = sphi 0, %s115
      %s117 = sphi 0, %s115
      %s118 = sphi 0, %s117
      %s132 = sphi 0, %s118
      %s138 = sphi 0, %s140
      %s141 = sphi 0, %s138
      %s142 = sphi 0, %s141
      %s158 = sphi 0, %s142
    $region4: #{tpu_custom_call.1} parent=1 // loop_header_branch
      %21 = sbr.rel (%p19) target = $region8
    $region5: #{tpu_custom_call.1} parent=1 // loop_body
      %s23 = ssub.s32 %s18, 1
      %s24 = ssub.s32 %s18, 2
      %s25 = sadd.s32 %s18, 1
      %s26 = ssub.s32 %s18, %s25
      %p27 = scmp.eq.s32.totalorder %s26, 0
      %s29 = sadd.s32 %s28, 1
      %s30 = scalar_select %p27, %s28, %s29
      %p33 = pneg %p27
      %p34 = scmp.eq.s32.totalorder %s18, 1
      %p35 = por %p33, %p34
      %p36 = scmp.ne.s32.totalorder %s28, %s31
      %p37 = scmp.eq.s32.totalorder %s18, 0
      %p38 = por %p36, %p37
      %p39 = scmp.ne.s32.totalorder %s28, %s31
      %p40 = scmp.eq.s32.totalorder %s23, 1
      %p41 = por %p39, %p40
      %p42 = scmp.ne.s32.totalorder %s31, %s32
      %p43 = scmp.eq.s32.totalorder %s23, 0
      %p44 = por %p42, %p43
      %p45 = scmp.ne.s32.totalorder %s31, %s32
      %p46 = scmp.eq.s32.totalorder %s24, 1
      %p47 = por %p45, %p46
      %p49 = scmp.ne.s32.totalorder %s32, %s48
      %p50 = scmp.eq.s32.totalorder %s24, 0
      %p51 = por %p49, %p50
      %s53 = sadd.s32 %s52, 1
      %p56 = scmp.eq.s32.totalorder %s18, 1
      %p57 = scmp.ne.s32.totalorder %s52, %s54
      %p58 = scmp.eq.s32.totalorder %s18, 0
      %p59 = por %p57, %p58
      %p60 = scmp.ne.s32.totalorder %s52, %s54
      %p61 = scmp.eq.s32.totalorder %s23, 1
      %p62 = por %p60, %p61
      %p63 = scmp.ne.s32.totalorder %s54, %s55
      %p64 = scmp.eq.s32.totalorder %s23, 0
      %p65 = por %p63, %p64
      %p66 = scmp.ne.s32.totalorder %s54, %s55
      %p67 = scmp.eq.s32.totalorder %s24, 1
      %p68 = por %p66, %p67
      %p70 = scmp.ne.s32.totalorder %s55, %s69
      %p71 = scmp.eq.s32.totalorder %s24, 0
      %p72 = por %p70, %p71
      %s74 = sadd.s32 %s73, 1
      %p77 = scmp.eq.s32.totalorder %s18, 1
      %p78 = scmp.ne.s32.totalorder %s73, %s75
      %p79 = scmp.eq.s32.totalorder %s18, 0
      %p80 = por %p78, %p79
      %p81 = scmp.ne.s32.totalorder %s73, %s75
      %p82 = scmp.eq.s32.totalorder %s23, 1
      %p83 = por %p81, %p82
      %p84 = scmp.ne.s32.totalorder %s75, %s76
      %p85 = scmp.eq.s32.totalorder %s23, 0
      %p86 = por %p84, %p85
      %p87 = scmp.ne.s32.totalorder %s75, %s76
      %p88 = scmp.eq.s32.totalorder %s24, 1
      %p89 = por %p87, %p88
      %p91 = scmp.ne.s32.totalorder %s76, %s90
      %p92 = scmp.eq.s32.totalorder %s24, 0
      %p93 = por %p91, %p92
      %s95 = sadd.s32 %s94, 1
      %p98 = scmp.eq.s32.totalorder %s18, 1
      %p99 = scmp.ne.s32.totalorder %s94, %s96
      %p100 = scmp.eq.s32.totalorder %s18, 0
      %p101 = por %p99, %p100
      %p102 = scmp.ne.s32.totalorder %s94, %s96
      %p103 = scmp.eq.s32.totalorder %s23, 1
      %p104 = por %p102, %p103
      %p105 = scmp.ne.s32.totalorder %s96, %s97
      %p106 = scmp.eq.s32.totalorder %s23, 0
      %p107 = por %p105, %p106
      %p108 = scmp.ne.s32.totalorder %s96, %s97
      %p109 = scmp.eq.s32.totalorder %s24, 1
      %p110 = por %p108, %p109
      %p112 = scmp.ne.s32.totalorder %s97, %s111
      %p113 = scmp.eq.s32.totalorder %s24, 0
      %p114 = por %p112, %p113
      %s116 = sadd.s32 %s115, 1
      %p119 = scmp.eq.s32.totalorder %s18, 1
      %p120 = scmp.ne.s32.totalorder %s115, %s117
      %p121 = scmp.eq.s32.totalorder %s18, 0
      %p122 = por %p120, %p121
      %p123 = scmp.ne.s32.totalorder %s115, %s117
      %p124 = scmp.eq.s32.totalorder %s23, 1
      %p125 = por %p123, %p124
      %p126 = scmp.ne.s32.totalorder %s117, %s118
      %p127 = scmp.eq.s32.totalorder %s23, 0
      %p128 = por %p126, %p127
      %p129 = scmp.ne.s32.totalorder %s117, %s118
      %p130 = scmp.eq.s32.totalorder %s24, 1
      %p131 = por %p129, %p130
      %p133 = scmp.ne.s32.totalorder %s118, %s132
      %p134 = scmp.eq.s32.totalorder %s24, 0
      %p135 = por %p133, %p134
      %s136 = ssub.s32 %s18, %s25
      %p137 = scmp.eq.s32.totalorder %s136, 0
      %s139 = sadd.s32 %s138, 1
      %s140 = scalar_select %p137, %s138, %s139
      %p143 = pneg %p137
      %p144 = scmp.eq.s32.totalorder %s18, 1
      %p145 = por %p143, %p144
      %p146 = scmp.ne.s32.totalorder %s138, %s141
      %p147 = scmp.eq.s32.totalorder %s18, 0
      %p148 = por %p146, %p147
      %p149 = scmp.ne.s32.totalorder %s138, %s141
      %p150 = scmp.eq.s32.totalorder %s23, 1
      %p151 = por %p149, %p150
      %p152 = scmp.ne.s32.totalorder %s141, %s142
      %p153 = scmp.eq.s32.totalorder %s23, 0
      %p154 = por %p152, %p153
      %p155 = scmp.ne.s32.totalorder %s141, %s142
      %p156 = scmp.eq.s32.totalorder %s24, 1
      %p157 = por %p155, %p156
      %p159 = scmp.ne.s32.totalorder %s142, %s158
      %p160 = scmp.eq.s32.totalorder %s24, 0
      %p161 = por %p159, %p160
      %p162 = scmp.le.s32.totalorder 1, %s18
      %p163 = scmp.lt.s32.totalorder %s18, 3
      %p164 = pnand %p162, %p163
      %p165 = pneg %p164
      // Predicated region
      $region9: #{tpu_custom_call.1} parent=5 // pred_check
        _
      $region10: #{tpu_custom_call.1} parent=5 // pred_check_branch
        %167 = sbr.rel (%p164) target = $region12
      $region11: #{tpu_custom_call.1} parent=5 // pred_region
        %s168 = ssub.s32 %s18, 1
        // Predicated region
        $region13: #{tpu_custom_call.1} parent=11 // pred_check
          %p169 = pneg %p65
        $region14: #{tpu_custom_call.1} parent=11 // pred_check_branch
          %171 = sbr.rel (%p169) target = $region16
        $region15: #{tpu_custom_call.1} parent=11 // pred_region
          %s173 = ssub.s32 6144, 6144
          %174 = vsyncadd [#allocation6], %s173
          %s175 = sshll.u32 [#allocation5], 4
          %s176 = int_to_ptr.vmem [resolvable:$true] %s175
          %181 = dma.hbm_to_vmem [thread:$0]  %s1, 6144, %s176, [#allocation6], 384, 384, 24
        $region16: #{tpu_custom_call.1} parent=11 // pred_fallthru
          _
        // Predicated region
        $region17: #{tpu_custom_call.1} parent=11 // pred_check
          %p182 = pneg %p86
        $region18: #{tpu_custom_call.1} parent=11 // pred_check_branch
          %184 = sbr.rel (%p182) target = $region20
        $region19: #{tpu_custom_call.1} parent=11 // pred_region
          _
        $region20: #{tpu_custom_call.1} parent=11 // pred_fallthru
          _
        // Predicated region
        $region21: #{tpu_custom_call.1} parent=11 // pred_check
          %p185 = pneg %p107
        $region22: #{tpu_custom_call.1} parent=11 // pred_check_branch
          %187 = sbr.rel (%p185) target = $region24
        $region23: #{tpu_custom_call.1} parent=11 // pred_region
          %s189 = ssub.s32 6144, 6144
          %190 = vsyncadd [#allocation6], %s189
          %s191 = sshll.u32 [#allocation7], 4
          %s192 = int_to_ptr.vmem [resolvable:$true] %s191
          %197 = dma.hbm_to_vmem [thread:$0]  %s3, 6144, %s192, [#allocation6], 64, 64, 4
        $region24: #{tpu_custom_call.1} parent=11 // pred_fallthru
          _
        // Predicated region
        $region25: #{tpu_custom_call.1} parent=11 // pred_check
          %p198 = pneg %p128
        $region26: #{tpu_custom_call.1} parent=11 // pred_check_branch
          %200 = sbr.rel (%p198) target = $region28
        $region27: #{tpu_custom_call.1} parent=11 // pred_region
          _
        $region28: #{tpu_custom_call.1} parent=11 // pred_fallthru
          _
      $region12: #{tpu_custom_call.1} parent=5 // pred_fallthru
        _
      %p201 = scmp.lt.s32.totalorder %s18, 2
      // Predicated region
      $region29: #{tpu_custom_call.1} parent=5 // pred_check
        %p202 = pneg %p201
      $region30: #{tpu_custom_call.1} parent=5 // pred_check_branch
        %204 = sbr.rel (%p202) target = $region32
      $region31: #{tpu_custom_call.1} parent=5 // pred_region
        // Predicated region
        $region33: #{tpu_custom_call.1} parent=31 // pred_check
          %p205 = pneg %p38
        $region34: #{tpu_custom_call.1} parent=31 // pred_check_branch
          %207 = sbr.rel (%p205) target = $region36
        $region35: #{tpu_custom_call.1} parent=31 // pred_region
          %s208 = sand.u32 %s28, 1
          %s209 = scalar_lea.sflag [#allocation3], %s208
          %s210 = sand.u32 %s28, 1
          %s211 = smul.addr %s210, 76
          %s212 = scalar_lea.vmem [#allocation2], %s211
          %s213 = smul.u32 19, %s18
          %s215 = ssub.s32 1216, 1216
          %216 = vsyncadd %s209, %s215
          %s217 = smul.addr %s213, 64
          %s218 = scalar_lea.hbm %s0, %s217
          %s219 = sshll.u32 %s212, 4
          %s220 = int_to_ptr.vmem [resolvable:$true] %s219
          %225 = dma.hbm_to_vmem [thread:$0]  %s218, 1216, %s220, %s209, 64, 64, 4
        $region36: #{tpu_custom_call.1} parent=31 // pred_fallthru
          _
      $region32: #{tpu_custom_call.1} parent=5 // pred_fallthru
        _
      %p226 = scmp.le.s32.totalorder 1, %s18
      %p227 = scmp.lt.s32.totalorder %s18, 3
      %p228 = pnand %p226, %p227
      %p229 = pneg %p228
      // Predicated region
      $region37: #{tpu_custom_call.1} parent=5 // pred_check
        _
      $region38: #{tpu_custom_call.1} parent=5 // pred_check_branch
        %231 = sbr.rel (%p228) target = $region40
      $region39: #{tpu_custom_call.1} parent=5 // pred_region
        %s232 = ssub.s32 %s18, 1
        %s233 = sand.u32 %s31, 1
        %s234 = scalar_lea.sflag [#allocation3], %s233
        %s235 = sand.u32 %s31, 1
        %s236 = smul.addr %s235, 76
        %s237 = scalar_lea.vmem [#allocation2], %s236
        // Predicated region
        $region41: #{tpu_custom_call.1} parent=39 // pred_check
          %p238 = pneg %p44
        $region42: #{tpu_custom_call.1} parent=39 // pred_check_branch
          %240 = sbr.rel (%p238) target = $region44
        $region43: #{tpu_custom_call.1} parent=39 // pred_region
          %241 = dma.done %s234, 1216
        $region44: #{tpu_custom_call.1} parent=39 // pred_fallthru
          _
        // Predicated region
        $region45: #{tpu_custom_call.1} parent=39 // pred_check
          %p242 = pneg %p65
        $region46: #{tpu_custom_call.1} parent=39 // pred_check_branch
          %244 = sbr.rel (%p242) target = $region48
        $region47: #{tpu_custom_call.1} parent=39 // pred_region
          %245 = dma.done [#allocation6], 6144
        $region48: #{tpu_custom_call.1} parent=39 // pred_fallthru
          _
        // Predicated region
        $region49: #{tpu_custom_call.1} parent=39 // pred_check
          %p246 = pneg %p107
        $region50: #{tpu_custom_call.1} parent=39 // pred_check_branch
          %248 = sbr.rel (%p246) target = $region52
        $region51: #{tpu_custom_call.1} parent=39 // pred_region
          %249 = dma.done [#allocation6], 6144
        $region52: #{tpu_custom_call.1} parent=39 // pred_fallthru
          _
        %s250 = sand.u32 %s31, 1
        %s251 = scalar_lea.sflag [#allocation3], %s250
        %s252 = sand.u32 %s31, 1
        %s253 = smul.addr %s252, 76
        %s254 = scalar_lea.vmem [#allocation2], %s253
        %p255 = pneg %p44
        %p256 = pneg %p41
        %p257 = pneg %p65
        %p258 = pneg %p62
        %p259 = pneg %p86
        %p260 = pneg %p83
        %p261 = pneg %p107
        %p262 = pneg %p104
        %p263 = pneg %p128
        %p264 = pneg %p125
        %p265 = pneg %p154
        %p266 = pneg %p151
        %s267 = sand.u32 %s141, 1
        %s268 = scalar_lea.sflag [#allocation4], %s267
        %s269 = sand.u32 %s141, 1
        %s270 = smul.addr %s269, 152
        %s271 = scalar_lea.vmem [#allocation8], %s270
        %s272 = smul.u32 19, %s23
        %s273 = smul.u32 19, %s23
        %v275 = vld [vmem:[%s237] sm:$0xf]
        %v276 = vld [vmem:[%s237 + $0x4] sm:$0xf]
        %v277 = vld [vmem:[%s237 + $0x8] sm:$0xf]
        %v278 = vld [vmem:[%s237 + $0xc] sm:$0xf]
        %v279 = vld [vmem:[%s237 + $0x10] sm:$0xf]
        %v280 = vld [vmem:[%s237 + $0x14] sm:$0xf]
        %v281 = vld [vmem:[%s237 + $0x18] sm:$0xf]
        %v282 = vld [vmem:[%s237 + $0x1c] sm:$0xf]
        %v283 = vld [vmem:[%s237 + $0x20] sm:$0xf]
        %v284 = vld [vmem:[%s237 + $0x24] sm:$0xf]
        %v285 = vld [vmem:[%s237 + $0x28] sm:$0xf]
        %v286 = vld [vmem:[%s237 + $0x2c] sm:$0xf]
        %v287 = vld [vmem:[%s237 + $0x30] sm:$0xf]
        %v288 = vld [vmem:[%s237 + $0x34] sm:$0xf]
        %v289 = vld [vmem:[%s237 + $0x38] sm:$0xf]
        %v290 = vld [vmem:[%s237 + $0x3c] sm:$0xf]
        %v291 = vld [vmem:[%s237 + $0x40] sm:$0xf]
        %v292 = vld [vmem:[%s237 + $0x44] sm:$0xf]
        %v293 = vld [vmem:[%s237 + $0x48] sm:$0xf]
        %v294 = vld [vmem:[#allocation5] sm:$0xff]
        %v295 = vld [vmem:[#allocation5 + $0x8] sm:$0xff]
        %v296 = vld [vmem:[#allocation5 + $0x10] sm:$0xff]
        %v297 = vld [vmem:[#allocation5 + $0x18] sm:$0xff]
        %v298 = vld [vmem:[#allocation5 + $0x20] sm:$0xff]
        %v299 = vld [vmem:[#allocation5 + $0x28] sm:$0xff]
        %v300 = vld [vmem:[#allocation5 + $0x30] sm:$0xff]
        %v301 = vld [vmem:[#allocation5 + $0x38] sm:$0xff]
        %v302 = vld [vmem:[#allocation5 + $0x40] sm:$0xff]
        %v303 = vld [vmem:[#allocation5 + $0x48] sm:$0xff]
        %v304 = vld [vmem:[#allocation5 + $0x50] sm:$0xff]
        %v305 = vld [vmem:[#allocation5 + $0x58] sm:$0xff]
        %v306 = vld [vmem:[#allocation5 + $0x60] sm:$0xff]
        %v307 = vld [vmem:[#allocation5 + $0x68] sm:$0xff]
        %v308 = vld [vmem:[#allocation5 + $0x70] sm:$0xff]
        %v309 = vld [vmem:[#allocation5 + $0x78] sm:$0xff]
        %v310 = vld [vmem:[#allocation5 + $0x80] sm:$0xff]
        %v311 = vld [vmem:[#allocation5 + $0x88] sm:$0xff]
        %v312 = vld [vmem:[#allocation5 + $0x90] sm:$0xff]
        %v313 = vld [vmem:[#allocation5 + $0x98] sm:$0xff]
        %v314 = vld [vmem:[#allocation5 + $0xa0] sm:$0xff]
        %v315 = vld [vmem:[#allocation5 + $0xa8] sm:$0xff]
        %v316 = vld [vmem:[#allocation5 + $0xb0] sm:$0xff]
        %v317 = vld [vmem:[#allocation5 + $0xb8] sm:$0xff]
        %v318 = vld [vmem:[#allocation5 + $0xc0] sm:$0xff]
        %v319 = vld [vmem:[#allocation5 + $0xc8] sm:$0xff]
        %v320 = vld [vmem:[#allocation5 + $0xd0] sm:$0xff]
        %v321 = vld [vmem:[#allocation5 + $0xd8] sm:$0xff]
        %v322 = vld [vmem:[#allocation5 + $0xe0] sm:$0xff]
        %v323 = vld [vmem:[#allocation5 + $0xe8] sm:$0xff]
        %v324 = vld [vmem:[#allocation5 + $0xf0] sm:$0xff]
        %v325 = vld [vmem:[#allocation5 + $0xf8] sm:$0xff]
        %v326 = vld [vmem:[#allocation5 + $0x100] sm:$0xff]
        %v327 = vld [vmem:[#allocation5 + $0x108] sm:$0xff]
        %v328 = vld [vmem:[#allocation5 + $0x110] sm:$0xff]
        %v329 = vld [vmem:[#allocation5 + $0x118] sm:$0xff]
        %v330 = vld [vmem:[#allocation5 + $0x120] sm:$0xff]
        %v331 = vld [vmem:[#allocation5 + $0x128] sm:$0xff]
        %v332 = vld [vmem:[#allocation5 + $0x130] sm:$0xff]
        %v333 = vld [vmem:[#allocation5 + $0x138] sm:$0xff]
        %v334 = vld [vmem:[#allocation5 + $0x140] sm:$0xff]
        %v335 = vld [vmem:[#allocation5 + $0x148] sm:$0xff]
        %v336 = vld [vmem:[#allocation5 + $0x150] sm:$0xff]
        %v337 = vld [vmem:[#allocation5 + $0x158] sm:$0xff]
        %v338 = vld [vmem:[#allocation5 + $0x160] sm:$0xff]
        %v339 = vld [vmem:[#allocation5 + $0x168] sm:$0xff]
        %v340 = vld [vmem:[#allocation5 + $0x170] sm:$0xff]
        %v341 = vld [vmem:[#allocation5 + $0x178] sm:$0xff]
        %v342 = vld [vmem:[%s2] sm:$0x3f]
        %v344 = vlaneseq
        %v345 = vshrl.u32 %v344, 7
        %v346 = vsub.s32 0, %v345
        %v347 = vrot.slane %v342, %v346
        %v348 = vlaneseq
        %v349 = vshrl.u32 %v348, 7
        %v350 = vsub.s32 1, %v349
        %v351 = vrot.slane %v342, %v350
        %v352 = vlaneseq
        %v353 = vshrl.u32 %v352, 7
        %v354 = vsub.s32 2, %v353
        %v355 = vrot.slane %v342, %v354
        %v356 = vlaneseq
        %v357 = vshrl.u32 %v356, 7
        %v358 = vsub.s32 3, %v357
        %v359 = vrot.slane %v342, %v358
        %v360 = vlaneseq
        %v361 = vshrl.u32 %v360, 7
        %v362 = vsub.s32 4, %v361
        %v363 = vrot.slane %v342, %v362
        %v364 = vlaneseq
        %v365 = vshrl.u32 %v364, 7
        %v366 = vsub.s32 5, %v365
        %v367 = vrot.slane %v342, %v366
        %v393 = vunpack.c.l.b16 %v275
        %v394 = vunpack.c.l.b16 %v276
        %v395 = vunpack.c.l.b16 %v277
        %v396 = vunpack.c.l.b16 %v278
        %v397 = vunpack.c.l.b16 %v279
        %v398 = vunpack.c.l.b16 %v280
        %v399 = vunpack.c.l.b16 %v281
        %v400 = vunpack.c.l.b16 %v282
        %v401 = vunpack.c.l.b16 %v283
        %v402 = vunpack.c.l.b16 %v284
        %v403 = vunpack.c.l.b16 %v285
        %v404 = vunpack.c.l.b16 %v286
        %v405 = vunpack.c.l.b16 %v287
        %v406 = vunpack.c.l.b16 %v288
        %v407 = vunpack.c.l.b16 %v289
        %v408 = vunpack.c.l.b16 %v290
        %v409 = vunpack.c.l.b16 %v291
        %v410 = vunpack.c.l.b16 %v292
        %v411 = vunpack.c.l.b16 %v293
        %v412 = vpack.c.b16 %v394, %v393
        %v413 = vpack.c.b16 %v396, %v395
        %v414 = vpack.c.b16 %v398, %v397
        %v415 = vpack.c.b16 %v400, %v399
        %v416 = vpack.c.b16 %v402, %v401
        %v417 = vpack.c.b16 %v404, %v403
        %v418 = vpack.c.b16 %v406, %v405
        %v419 = vpack.c.b16 %v408, %v407
        %v420 = vpack.c.b16 %v410, %v409
        %v421 = vpack.c.b16 %v411, %v411
        %v480 = vunpack.c.l.b16 %v294
        %v481 = vunpack.c.h.b16 %v294
        %v482 = vunpack.c.l.b16 %v295
        %v483 = vunpack.c.h.b16 %v295
        %v484 = vunpack.c.l.b16 %v296
        %v485 = vunpack.c.h.b16 %v296
        %v486 = vunpack.c.l.b16 %v297
        %v487 = vunpack.c.h.b16 %v297
        %v488 = vunpack.c.l.b16 %v298
        %v489 = vunpack.c.h.b16 %v298
        %v490 = vunpack.c.l.b16 %v299
        %v491 = vunpack.c.h.b16 %v299
        %v492 = vunpack.c.l.b16 %v300
        %v493 = vunpack.c.h.b16 %v300
        %v494 = vunpack.c.l.b16 %v301
        %v495 = vunpack.c.h.b16 %v301
        %v496 = vunpack.c.l.b16 %v302
        %v497 = vunpack.c.h.b16 %v302
        %v498 = vunpack.c.l.b16 %v303
        %v499 = vunpack.c.h.b16 %v303
        %v500 = vunpack.c.l.b16 %v304
        %v501 = vunpack.c.h.b16 %v304
        %v502 = vunpack.c.l.b16 %v305
        %v503 = vunpack.c.h.b16 %v305
        %v504 = vunpack.c.l.b16 %v306
        %v505 = vunpack.c.h.b16 %v306
        %v506 = vunpack.c.l.b16 %v307
        %v507 = vunpack.c.h.b16 %v307
        %v508 = vunpack.c.l.b16 %v308
        %v509 = vunpack.c.h.b16 %v308
        %v510 = vunpack.c.l.b16 %v309
        %v511 = vunpack.c.h.b16 %v309
        %v512 = vunpack.c.l.b16 %v310
        %v513 = vunpack.c.h.b16 %v310
        %v514 = vunpack.c.l.b16 %v311
        %v515 = vunpack.c.h.b16 %v311
        %v516 = vunpack.c.l.b16 %v312
        %v517 = vunpack.c.h.b16 %v312
        %v518 = vunpack.c.l.b16 %v313
        %v519 = vunpack.c.h.b16 %v313
        %v520 = vunpack.c.l.b16 %v314
        %v521 = vunpack.c.h.b16 %v314
        %v522 = vunpack.c.l.b16 %v315
        %v523 = vunpack.c.h.b16 %v315
        %v524 = vunpack.c.l.b16 %v316
        %v525 = vunpack.c.h.b16 %v316
        %v526 = vunpack.c.l.b16 %v317
        %v527 = vunpack.c.h.b16 %v317
        %v528 = vunpack.c.l.b16 %v318
        %v529 = vunpack.c.h.b16 %v318
        %v530 = vunpack.c.l.b16 %v319
        %v531 = vunpack.c.h.b16 %v319
        %v532 = vunpack.c.l.b16 %v320
        %v533 = vunpack.c.h.b16 %v320
        %v534 = vunpack.c.l.b16 %v321
        %v535 = vunpack.c.h.b16 %v321
        %v536 = vunpack.c.l.b16 %v322
        %v537 = vunpack.c.h.b16 %v322
        %v538 = vunpack.c.l.b16 %v323
        %v539 = vunpack.c.h.b16 %v323
        %v540 = vunpack.c.l.b16 %v324
        %v541 = vunpack.c.h.b16 %v324
        %v542 = vunpack.c.l.b16 %v325
        %v543 = vunpack.c.h.b16 %v325
        %v544 = vunpack.c.l.b16 %v326
        %v545 = vunpack.c.h.b16 %v326
        %v546 = vunpack.c.l.b16 %v327
        %v547 = vunpack.c.h.b16 %v327
        %v548 = vunpack.c.l.b16 %v328
        %v549 = vunpack.c.h.b16 %v328
        %v550 = vunpack.c.l.b16 %v329
        %v551 = vunpack.c.h.b16 %v329
        %v552 = vunpack.c.l.b16 %v330
        %v553 = vunpack.c.h.b16 %v330
        %v554 = vunpack.c.l.b16 %v331
        %v555 = vunpack.c.h.b16 %v331
        %v556 = vunpack.c.l.b16 %v332
        %v557 = vunpack.c.h.b16 %v332
        %v558 = vunpack.c.l.b16 %v333
        %v559 = vunpack.c.h.b16 %v333
        %v560 = vunpack.c.l.b16 %v334
        %v561 = vunpack.c.h.b16 %v334
        %v562 = vunpack.c.l.b16 %v335
        %v563 = vunpack.c.h.b16 %v335
        %v564 = vunpack.c.l.b16 %v336
        %v565 = vunpack.c.h.b16 %v336
        %v566 = vunpack.c.l.b16 %v337
        %v567 = vunpack.c.h.b16 %v337
        %v568 = vunpack.c.l.b16 %v338
        %v569 = vunpack.c.h.b16 %v338
        %v570 = vunpack.c.l.b16 %v339
        %v571 = vunpack.c.h.b16 %v339
        %v572 = vunpack.c.l.b16 %v340
        %v573 = vunpack.c.h.b16 %v340
        %v574 = vunpack.c.l.b16 %v341
        %v575 = vunpack.c.h.b16 %v341
        %v576 = vpack.c.b16 %v486, %v480
        %v577 = vpack.c.b16 %v487, %v481
        %v578 = vpack.c.b16 %v488, %v482
        %v579 = vpack.c.b16 %v489, %v483
        %v580 = vpack.c.b16 %v490, %v484
        %v581 = vpack.c.b16 %v491, %v485
        %v582 = vpack.c.b16 %v498, %v492
        %v583 = vpack.c.b16 %v499, %v493
        %v584 = vpack.c.b16 %v500, %v494
        %v585 = vpack.c.b16 %v501, %v495
        %v586 = vpack.c.b16 %v502, %v496
        %v587 = vpack.c.b16 %v503, %v497
        %v588 = vpack.c.b16 %v510, %v504
        %v589 = vpack.c.b16 %v511, %v505
        %v590 = vpack.c.b16 %v512, %v506
        %v591 = vpack.c.b16 %v513, %v507
        %v592 = vpack.c.b16 %v514, %v508
        %v593 = vpack.c.b16 %v515, %v509
        %v594 = vpack.c.b16 %v522, %v516
        %v595 = vpack.c.b16 %v523, %v517
        %v596 = vpack.c.b16 %v524, %v518
        %v597 = vpack.c.b16 %v525, %v519
        %v598 = vpack.c.b16 %v526, %v520
        %v599 = vpack.c.b16 %v527, %v521
        %v600 = vpack.c.b16 %v534, %v528
        %v601 = vpack.c.b16 %v535, %v529
        %v602 = vpack.c.b16 %v536, %v530
        %v603 = vpack.c.b16 %v537, %v531
        %v604 = vpack.c.b16 %v538, %v532
        %v605 = vpack.c.b16 %v539, %v533
        %v606 = vpack.c.b16 %v546, %v540
        %v607 = vpack.c.b16 %v547, %v541
        %v608 = vpack.c.b16 %v548, %v542
        %v609 = vpack.c.b16 %v549, %v543
        %v610 = vpack.c.b16 %v550, %v544
        %v611 = vpack.c.b16 %v551, %v545
        %v612 = vpack.c.b16 %v558, %v552
        %v613 = vpack.c.b16 %v559, %v553
        %v614 = vpack.c.b16 %v560, %v554
        %v615 = vpack.c.b16 %v561, %v555
        %v616 = vpack.c.b16 %v562, %v556
        %v617 = vpack.c.b16 %v563, %v557
        %v618 = vpack.c.b16 %v570, %v564
        %v619 = vpack.c.b16 %v571, %v565
        %v620 = vpack.c.b16 %v572, %v566
        %v621 = vpack.c.b16 %v573, %v567
        %v622 = vpack.c.b16 %v574, %v568
        %v623 = vpack.c.b16 %v575, %v569
        %672 = vmatprep.subr.bf16.mxu0 %v577
        %673 = vmatpush1.bf16.msra.mxu0 %v576
        %674 = vmatprep.subr.bf16.mxu0 %v583
        %675 = vmatpush1.bf16.msra.mxu0 %v582
        %676 = vmatprep.subr.bf16.mxu0 %v589
        %677 = vmatpush1.bf16.msra.mxu0 %v588
        %678 = vmatprep.subr.bf16.mxu0 %v595
        %679 = vmatpush1.bf16.msra.mxu0 %v594
        %680 = vmatprep.subr.bf16.mxu0 %v601
        %681 = vmatpush1.bf16.msra.mxu0 %v600
        %682 = vmatprep.subr.bf16.mxu0 %v607
        %683 = vmatpush1.bf16.msra.mxu0 %v606
        %684 = vmatprep.subr.bf16.mxu0 %v613
        %685 = vmatpush1.bf16.msra.mxu0 %v612
        %686 = vmatprep.subr.bf16.mxu0 %v619
        %687 = vmatpush1.bf16.msra.mxu0 %v618
        %688 = vmatprep.subr.bf16.mxu0 0
        %689 = vmatpush1.bf16.msra.mxu0 0
        %690 = vmatprep.subr.bf16.mxu0 0
        %691 = vmatpush1.bf16.msra.mxu0 0
        %692 = vmatprep.subr.bf16.mxu0 0
        %693 = vmatpush1.bf16.msra.mxu0 0
        %694 = vmatprep.subr.bf16.mxu0 0
        %695 = vmatpush1.bf16.msra.mxu0 0
        %696 = vmatprep.subr.bf16.mxu0 0
        %697 = vmatpush1.bf16.msra.mxu0 0
        %698 = vmatprep.subr.bf16.mxu0 0
        %699 = vmatpush1.bf16.msra.mxu0 0
        %700 = vmatprep.subr.bf16.mxu0 0
        %701 = vmatpush1.bf16.msra.mxu0 0
        %702 = vmatprep.subr.bf16.mxu0 0
        %703 = vmatpush1.bf16.msra.mxu0 0
        %704 = vmatprep.mubr.bf16.mxu0 0
        %705 = vmatmul.mubr.bf16.gmra.mrb[0].mxu0 %v412
        %v706 = vpop.f32.mrb[0].mxu0
        %v707 = vadd.f32 %v347, %v706
        %v708 = vpop.f32.mrb[0].mxu0
        %v709 = vadd.f32 %v351, %v708
        %v710 = vpop.f32.mrb[0].mxu0
        %v711 = vadd.f32 %v347, %v710
        %v712 = vpop.f32.mrb[0].mxu0
        %v713 = vadd.f32 %v351, %v712
        %714 = vmatprep.mubr.bf16.mxu0 0
        %715 = vmatmul.mubr.bf16.gmra.mrb[0].mxu0 %v413
        %v716 = vpop.f32.mrb[0].mxu0
        %v717 = vadd.f32 %v347, %v716
        %v718 = vpop.f32.mrb[0].mxu0
        %v719 = vadd.f32 %v351, %v718
        %v720 = vpop.f32.mrb[0].mxu0
        %v721 = vadd.f32 %v347, %v720
        %v722 = vpop.f32.mrb[0].mxu0
        %v723 = vadd.f32 %v351, %v722
        %724 = vmatprep.mubr.bf16.mxu0 0
        %725 = vmatmul.mubr.bf16.gmra.mrb[0].mxu0 %v414
        %v726 = vpop.f32.mrb[0].mxu0
        %v727 = vadd.f32 %v347, %v726
        %v728 = vpop.f32.mrb[0].mxu0
        %v729 = vadd.f32 %v351, %v728
        %v730 = vpop.f32.mrb[0].mxu0
        %v731 = vadd.f32 %v347, %v730
        %v732 = vpop.f32.mrb[0].mxu0
        %v733 = vadd.f32 %v351, %v732
        %734 = vmatprep.mubr.bf16.mxu0 0
        %735 = vmatmul.mubr.bf16.gmra.mrb[0].mxu0 %v415
        %v736 = vpop.f32.mrb[0].mxu0
        %v737 = vadd.f32 %v347, %v736
        %v738 = vpop.f32.mrb[0].mxu0
        %v739 = vadd.f32 %v351, %v738
        %v740 = vpop.f32.mrb[0].mxu0
        %v741 = vadd.f32 %v347, %v740
        %v742 = vpop.f32.mrb[0].mxu0
        %v743 = vadd.f32 %v351, %v742
        %744 = vmatprep.mubr.bf16.mxu0 0
        %745 = vmatmul.mubr.bf16.gmra.mrb[0].mxu0 %v416
        %v746 = vpop.f32.mrb[0].mxu0
        %v747 = vadd.f32 %v347, %v746
        %v748 = vpop.f32.mrb[0].mxu0
        %v749 = vadd.f32 %v351, %v748
        %v750 = vpop.f32.mrb[0].mxu0
        %v751 = vadd.f32 %v347, %v750
        %v752 = vpop.f32.mrb[0].mxu0
        %v753 = vadd.f32 %v351, %v752
        %754 = vmatprep.mubr.bf16.mxu0 0
        %755 = vmatmul.mubr.bf16.gmra.mrb[0].mxu0 %v417
        %v756 = vpop.f32.mrb[0].mxu0
        %v757 = vadd.f32 %v347, %v756
        %v758 = vpop.f32.mrb[0].mxu0
        %v759 = vadd.f32 %v351, %v758
        %v760 = vpop.f32.mrb[0].mxu0
        %v761 = vadd.f32 %v347, %v760
        %v762 = vpop.f32.mrb[0].mxu0
        %v763 = vadd.f32 %v351, %v762
        %764 = vmatprep.mubr.bf16.mxu0 0
        %765 = vmatmul.mubr.bf16.gmra.mrb[0].mxu0 %v418
        %v766 = vpop.f32.mrb[0].mxu0
        %v767 = vadd.f32 %v347, %v766
        %v768 = vpop.f32.mrb[0].mxu0
        %v769 = vadd.f32 %v351, %v768
        %v770 = vpop.f32.mrb[0].mxu0
        %v771 = vadd.f32 %v347, %v770
        %v772 = vpop.f32.mrb[0].mxu0
        %v773 = vadd.f32 %v351, %v772
        %774 = vmatprep.mubr.bf16.mxu0 0
        %775 = vmatmul.mubr.bf16.gmra.mrb[0].mxu0 %v419
        %v776 = vpop.f32.mrb[0].mxu0
        %v777 = vadd.f32 %v347, %v776
        %v778 = vpop.f32.mrb[0].mxu0
        %v779 = vadd.f32 %v351, %v778
        %v780 = vpop.f32.mrb[0].mxu0
        %v781 = vadd.f32 %v347, %v780
        %v782 = vpop.f32.mrb[0].mxu0
        %v783 = vadd.f32 %v351, %v782
        %784 = vmatprep.mubr.bf16.mxu0 0
        %785 = vmatmul.mubr.bf16.gmra.mrb[0].mxu0 %v420
        %v786 = vpop.f32.mrb[0].mxu0
        %v787 = vadd.f32 %v347, %v786
        %v788 = vpop.f32.mrb[0].mxu0
        %v789 = vadd.f32 %v351, %v788
        %v790 = vpop.f32.mrb[0].mxu0
        %v791 = vadd.f32 %v347, %v790
        %v792 = vpop.f32.mrb[0].mxu0
        %v793 = vadd.f32 %v351, %v792
        %794 = vmatprep.mubr.bf16.mxu0 0
        %795 = vmatmul.mubr.bf16.gmra.mrb[0].mxu0 %v421
        %v796 = vpop.f32.mrb[0].mxu0
        %v797 = vadd.f32 %v347, %v796
        %v798 = vpop.f32.mrb[0].mxu0
        %v799 = vadd.f32 %v351, %v798
        %v800 = vpop.f32.mrb[0].mxu0
        %v801 = vpop.f32.mrb[0].mxu0
        %802 = vdwg.mxu0
        %803 = vmatprep.subr.bf16.mxu0 %v579
        %804 = vmatpush1.bf16.msra.mxu0 %v578
        %805 = vmatprep.subr.bf16.mxu0 %v585
        %806 = vmatpush1.bf16.msra.mxu0 %v584
        %807 = vmatprep.subr.bf16.mxu0 %v591
        %808 = vmatpush1.bf16.msra.mxu0 %v590
        %809 = vmatprep.subr.bf16.mxu0 %v597
        %810 = vmatpush1.bf16.msra.mxu0 %v596
        %811 = vmatprep.subr.bf16.mxu0 %v603
        %812 = vmatpush1.bf16.msra.mxu0 %v602
        %813 = vmatprep.subr.bf16.mxu0 %v609
        %814 = vmatpush1.bf16.msra.mxu0 %v608
        %815 = vmatprep.subr.bf16.mxu0 %v615
        %816 = vmatpush1.bf16.msra.mxu0 %v614
        %817 = vmatprep.subr.bf16.mxu0 %v621
        %818 = vmatpush1.bf16.msra.mxu0 %v620
        %819 = vmatprep.subr.bf16.mxu0 0
        %820 = vmatpush1.bf16.msra.mxu0 0
        %821 = vmatprep.subr.bf16.mxu0 0
        %822 = vmatpush1.bf16.msra.mxu0 0
        %823 = vmatprep.subr.bf16.mxu0 0
        %824 = vmatpush1.bf16.msra.mxu0 0
        %825 = vmatprep.subr.bf16.mxu0 0
        %826 = vmatpush1.bf16.msra.mxu0 0
        %827 = vmatprep.subr.bf16.mxu0 0
        %828 = vmatpush1.bf16.msra.mxu0 0
        %829 = vmatprep.subr.bf16.mxu0 0
        %830 = vmatpush1.bf16.msra.mxu0 0
        %831 = vmatprep.subr.bf16.mxu0 0
        %832 = vmatpush1.bf16.msra.mxu0 0
        %833 = vmatprep.subr.bf16.mxu0 0
        %834 = vmatpush1.bf16.msra.mxu0 0
        %835 = vmatprep.mubr.bf16.mxu0 0
        %836 = vmatmul.mubr.bf16.gmra.mrb[0].mxu0 %v412
        %v837 = vpop.f32.mrb[0].mxu0
        %v838 = vadd.f32 %v355, %v837
        %v839 = vpop.f32.mrb[0].mxu0
        %v840 = vadd.f32 %v359, %v839
        %v841 = vpop.f32.mrb[0].mxu0
        %v842 = vadd.f32 %v355, %v841
        %v843 = vpop.f32.mrb[0].mxu0
        %v844 = vadd.f32 %v359, %v843
        %845 = vmatprep.mubr.bf16.mxu0 0
        %846 = vmatmul.mubr.bf16.gmra.mrb[0].mxu0 %v413
        %v847 = vpop.f32.mrb[0].mxu0
        %v848 = vadd.f32 %v355, %v847
        %v849 = vpop.f32.mrb[0].mxu0
        %v850 = vadd.f32 %v359, %v849
        %v851 = vpop.f32.mrb[0].mxu0
        %v852 = vadd.f32 %v355, %v851
        %v853 = vpop.f32.mrb[0].mxu0
        %v854 = vadd.f32 %v359, %v853
        %855 = vmatprep.mubr.bf16.mxu0 0
        %856 = vmatmul.mubr.bf16.gmra.mrb[0].mxu0 %v414
        %v857 = vpop.f32.mrb[0].mxu0
        %v858 = vadd.f32 %v355, %v857
        %v859 = vpop.f32.mrb[0].mxu0
        %v860 = vadd.f32 %v359, %v859
        %v861 = vpop.f32.mrb[0].mxu0
        %v862 = vadd.f32 %v355, %v861
        %v863 = vpop.f32.mrb[0].mxu0
        %v864 = vadd.f32 %v359, %v863
        %865 = vmatprep.mubr.bf16.mxu0 0
        %866 = vmatmul.mubr.bf16.gmra.mrb[0].mxu0 %v415
        %v867 = vpop.f32.mrb[0].mxu0
        %v868 = vadd.f32 %v355, %v867
        %v869 = vpop.f32.mrb[0].mxu0
        %v870 = vadd.f32 %v359, %v869
        %v871 = vpop.f32.mrb[0].mxu0
        %v872 = vadd.f32 %v355, %v871
        %v873 = vpop.f32.mrb[0].mxu0
        %v874 = vadd.f32 %v359, %v873
        %875 = vmatprep.mubr.bf16.mxu0 0
        %876 = vmatmul.mubr.bf16.gmra.mrb[0].mxu0 %v416
        %v877 = vpop.f32.mrb[0].mxu0
        %v878 = vadd.f32 %v355, %v877
        %v879 = vpop.f32.mrb[0].mxu0
        %v880 = vadd.f32 %v359, %v879
        %v881 = vpop.f32.mrb[0].mxu0
        %v882 = vadd.f32 %v355, %v881
        %v883 = vpop.f32.mrb[0].mxu0
        %v884 = vadd.f32 %v359, %v883
        %885 = vmatprep.mubr.bf16.mxu0 0
        %886 = vmatmul.mubr.bf16.gmra.mrb[0].mxu0 %v417
        %v887 = vpop.f32.mrb[0].mxu0
        %v888 = vadd.f32 %v355, %v887
        %v889 = vpop.f32.mrb[0].mxu0
        %v890 = vadd.f32 %v359, %v889
        %v891 = vpop.f32.mrb[0].mxu0
        %v892 = vadd.f32 %v355, %v891
        %v893 = vpop.f32.mrb[0].mxu0
        %v894 = vadd.f32 %v359, %v893
        %895 = vmatprep.mubr.bf16.mxu0 0
        %896 = vmatmul.mubr.bf16.gmra.mrb[0].mxu0 %v418
        %v897 = vpop.f32.mrb[0].mxu0
        %v898 = vadd.f32 %v355, %v897
        %v899 = vpop.f32.mrb[0].mxu0
        %v900 = vadd.f32 %v359, %v899
        %v901 = vpop.f32.mrb[0].mxu0
        %v902 = vadd.f32 %v355, %v901
        %v903 = vpop.f32.mrb[0].mxu0
        %v904 = vadd.f32 %v359, %v903
        %905 = vmatprep.mubr.bf16.mxu0 0
        %906 = vmatmul.mubr.bf16.gmra.mrb[0].mxu0 %v419
        %v907 = vpop.f32.mrb[0].mxu0
        %v908 = vadd.f32 %v355, %v907
        %v909 = vpop.f32.mrb[0].mxu0
        %v910 = vadd.f32 %v359, %v909
        %v911 = vpop.f32.mrb[0].mxu0
        %v912 = vadd.f32 %v355, %v911
        %v913 = vpop.f32.mrb[0].mxu0
        %v914 = vadd.f32 %v359, %v913
        %915 = vmatprep.mubr.bf16.mxu0 0
        %916 = vmatmul.mubr.bf16.gmra.mrb[0].mxu0 %v420
        %v917 = vpop.f32.mrb[0].mxu0
        %v918 = vadd.f32 %v355, %v917
        %v919 = vpop.f32.mrb[0].mxu0
        %v920 = vadd.f32 %v359, %v919
        %v921 = vpop.f32.mrb[0].mxu0
        %v922 = vadd.f32 %v355, %v921
        %v923 = vpop.f32.mrb[0].mxu0
        %v924 = vadd.f32 %v359, %v923
        %925 = vmatprep.mubr.bf16.mxu0 0
        %926 = vmatmul.mubr.bf16.gmra.mrb[0].mxu0 %v421
        %v927 = vpop.f32.mrb[0].mxu0
        %v928 = vadd.f32 %v355, %v927
        %v929 = vpop.f32.mrb[0].mxu0
        %v930 = vadd.f32 %v359, %v929
        %v931 = vpop.f32.mrb[0].mxu0
        %v932 = vpop.f32.mrb[0].mxu0
        %933 = vdwg.mxu0
        %934 = vmatprep.subr.bf16.mxu0 %v581
        %935 = vmatpush1.bf16.msra.mxu0 %v580
        %936 = vmatprep.subr.bf16.mxu0 %v587
        %937 = vmatpush1.bf16.msra.mxu0 %v586
        %938 = vmatprep.subr.bf16.mxu0 %v593
        %939 = vmatpush1.bf16.msra.mxu0 %v592
        %940 = vmatprep.subr.bf16.mxu0 %v599
        %941 = vmatpush1.bf16.msra.mxu0 %v598
        %942 = vmatprep.subr.bf16.mxu0 %v605
        %943 = vmatpush1.bf16.msra.mxu0 %v604
        %944 = vmatprep.subr.bf16.mxu0 %v611
        %945 = vmatpush1.bf16.msra.mxu0 %v610
        %946 = vmatprep.subr.bf16.mxu0 %v617
        %947 = vmatpush1.bf16.msra.mxu0 %v616
        %948 = vmatprep.subr.bf16.mxu0 %v623
        %949 = vmatpush1.bf16.msra.mxu0 %v622
        %950 = vmatprep.subr.bf16.mxu0 0
        %951 = vmatpush1.bf16.msra.mxu0 0
        %952 = vmatprep.subr.bf16.mxu0 0
        %953 = vmatpush1.bf16.msra.mxu0 0
        %954 = vmatprep.subr.bf16.mxu0 0
        %955 = vmatpush1.bf16.msra.mxu0 0
        %956 = vmatprep.subr.bf16.mxu0 0
        %957 = vmatpush1.bf16.msra.mxu0 0
        %958 = vmatprep.subr.bf16.mxu0 0
        %959 = vmatpush1.bf16.msra.mxu0 0
        %960 = vmatprep.subr.bf16.mxu0 0
        %961 = vmatpush1.bf16.msra.mxu0 0
        %962 = vmatprep.subr.bf16.mxu0 0
        %963 = vmatpush1.bf16.msra.mxu0 0
        %964 = vmatprep.subr.bf16.mxu0 0
        %965 = vmatpush1.bf16.msra.mxu0 0
        %966 = vmatprep.mubr.bf16.mxu0 0
        %967 = vmatmul.mubr.bf16.gmra.mrb[0].mxu0 %v412
        %v968 = vpop.f32.mrb[0].mxu0
        %v969 = vadd.f32 %v363, %v968
        %v970 = vpop.f32.mrb[0].mxu0
        %v971 = vadd.f32 %v367, %v970
        %v972 = vpop.f32.mrb[0].mxu0
        %v973 = vadd.f32 %v363, %v972
        %v974 = vpop.f32.mrb[0].mxu0
        %v975 = vadd.f32 %v367, %v974
        %976 = vmatprep.mubr.bf16.mxu0 0
        %977 = vmatmul.mubr.bf16.gmra.mrb[0].mxu0 %v413
        %v978 = vpop.f32.mrb[0].mxu0
        %v979 = vadd.f32 %v363, %v978
        %v980 = vpop.f32.mrb[0].mxu0
        %v981 = vadd.f32 %v367, %v980
        %v982 = vpop.f32.mrb[0].mxu0
        %v983 = vadd.f32 %v363, %v982
        %v984 = vpop.f32.mrb[0].mxu0
        %v985 = vadd.f32 %v367, %v984
        %986 = vmatprep.mubr.bf16.mxu0 0
        %987 = vmatmul.mubr.bf16.gmra.mrb[0].mxu0 %v414
        %v988 = vpop.f32.mrb[0].mxu0
        %v989 = vadd.f32 %v363, %v988
        %v990 = vpop.f32.mrb[0].mxu0
        %v991 = vadd.f32 %v367, %v990
        %v992 = vpop.f32.mrb[0].mxu0
        %v993 = vadd.f32 %v363, %v992
        %v994 = vpop.f32.mrb[0].mxu0
        %v995 = vadd.f32 %v367, %v994
        %996 = vmatprep.mubr.bf16.mxu0 0
        %997 = vmatmul.mubr.bf16.gmra.mrb[0].mxu0 %v415
        %v998 = vpop.f32.mrb[0].mxu0
        %v999 = vadd.f32 %v363, %v998
        %v1000 = vpop.f32.mrb[0].mxu0
        %v1001 = vadd.f32 %v367, %v1000
        %v1002 = vpop.f32.mrb[0].mxu0
        %v1003 = vadd.f32 %v363, %v1002
        %v1004 = vpop.f32.mrb[0].mxu0
        %v1005 = vadd.f32 %v367, %v1004
        %1006 = vmatprep.mubr.bf16.mxu0 0
        %1007 = vmatmul.mubr.bf16.gmra.mrb[0].mxu0 %v416
        %v1008 = vpop.f32.mrb[0].mxu0
        %v1009 = vadd.f32 %v363, %v1008
        %v1010 = vpop.f32.mrb[0].mxu0
        %v1011 = vadd.f32 %v367, %v1010
        %v1012 = vpop.f32.mrb[0].mxu0
        %v1013 = vadd.f32 %v363, %v1012
        %v1014 = vpop.f32.mrb[0].mxu0
        %v1015 = vadd.f32 %v367, %v1014
        %1016 = vmatprep.mubr.bf16.mxu0 0
        %1017 = vmatmul.mubr.bf16.gmra.mrb[0].mxu0 %v417
        %v1018 = vpop.f32.mrb[0].mxu0
        %v1019 = vadd.f32 %v363, %v1018
        %v1020 = vpop.f32.mrb[0].mxu0
        %v1021 = vadd.f32 %v367, %v1020
        %v1022 = vpop.f32.mrb[0].mxu0
        %v1023 = vadd.f32 %v363, %v1022
        %v1024 = vpop.f32.mrb[0].mxu0
        %v1025 = vadd.f32 %v367, %v1024
        %1026 = vmatprep.mubr.bf16.mxu0 0
        %1027 = vmatmul.mubr.bf16.gmra.mrb[0].mxu0 %v418
        %v1028 = vpop.f32.mrb[0].mxu0
        %v1029 = vadd.f32 %v363, %v1028
        %v1030 = vpop.f32.mrb[0].mxu0
        %v1031 = vadd.f32 %v367, %v1030
        %v1032 = vpop.f32.mrb[0].mxu0
        %v1033 = vadd.f32 %v363, %v1032
        %v1034 = vpop.f32.mrb[0].mxu0
        %v1035 = vadd.f32 %v367, %v1034
        %1036 = vmatprep.mubr.bf16.mxu0 0
        %1037 = vmatmul.mubr.bf16.gmra.mrb[0].mxu0 %v419
        %v1038 = vpop.f32.mrb[0].mxu0
        %v1039 = vadd.f32 %v363, %v1038
        %v1040 = vpop.f32.mrb[0].mxu0
        %v1041 = vadd.f32 %v367, %v1040
        %v1042 = vpop.f32.mrb[0].mxu0
        %v1043 = vadd.f32 %v363, %v1042
        %v1044 = vpop.f32.mrb[0].mxu0
        %v1045 = vadd.f32 %v367, %v1044
        %1046 = vmatprep.mubr.bf16.mxu0 0
        %1047 = vmatmul.mubr.bf16.gmra.mrb[0].mxu0 %v420
        %v1048 = vpop.f32.mrb[0].mxu0
        %v1049 = vadd.f32 %v363, %v1048
        %v1050 = vpop.f32.mrb[0].mxu0
        %v1051 = vadd.f32 %v367, %v1050
        %v1052 = vpop.f32.mrb[0].mxu0
        %v1053 = vadd.f32 %v363, %v1052
        %v1054 = vpop.f32.mrb[0].mxu0
        %v1055 = vadd.f32 %v367, %v1054
        %1056 = vmatprep.mubr.bf16.mxu0 0
        %1057 = vmatmul.mubr.bf16.gmra.mrb[0].mxu0 %v421
        %v1058 = vpop.f32.mrb[0].mxu0
        %v1059 = vadd.f32 %v363, %v1058
        %v1060 = vpop.f32.mrb[0].mxu0
        %v1061 = vadd.f32 %v367, %v1060
        %v1062 = vpop.f32.mrb[0].mxu0
        %v1063 = vpop.f32.mrb[0].mxu0
        %1064 = vdwg.mxu0
        %v1065 = vmax.f32 %v707, 0.0
        %v1066 = vmax.f32 %v709, 0.0
        %v1067 = vmax.f32 %v838, 0.0
        %v1068 = vmax.f32 %v840, 0.0
        %v1069 = vmax.f32 %v969, 0.0
        %v1070 = vmax.f32 %v971, 0.0
        %v1071 = vmax.f32 %v711, 0.0
        %v1072 = vmax.f32 %v713, 0.0
        %v1073 = vmax.f32 %v842, 0.0
        %v1074 = vmax.f32 %v844, 0.0
        %v1075 = vmax.f32 %v973, 0.0
        %v1076 = vmax.f32 %v975, 0.0
        %v1077 = vmax.f32 %v717, 0.0
        %v1078 = vmax.f32 %v719, 0.0
        %v1079 = vmax.f32 %v848, 0.0
        %v1080 = vmax.f32 %v850, 0.0
        %v1081 = vmax.f32 %v979, 0.0
        %v1082 = vmax.f32 %v981, 0.0
        %v1083 = vmax.f32 %v721, 0.0
        %v1084 = vmax.f32 %v723, 0.0
        %v1085 = vmax.f32 %v852, 0.0
        %v1086 = vmax.f32 %v854, 0.0
        %v1087 = vmax.f32 %v983, 0.0
        %v1088 = vmax.f32 %v985, 0.0
        %v1089 = vmax.f32 %v727, 0.0
        %v1090 = vmax.f32 %v729, 0.0
        %v1091 = vmax.f32 %v858, 0.0
        %v1092 = vmax.f32 %v860, 0.0
        %v1093 = vmax.f32 %v989, 0.0
        %v1094 = vmax.f32 %v991, 0.0
        %v1095 = vmax.f32 %v731, 0.0
        %v1096 = vmax.f32 %v733, 0.0
        %v1097 = vmax.f32 %v862, 0.0
        %v1098 = vmax.f32 %v864, 0.0
        %v1099 = vmax.f32 %v993, 0.0
        %v1100 = vmax.f32 %v995, 0.0
        %v1101 = vmax.f32 %v737, 0.0
        %v1102 = vmax.f32 %v739, 0.0
        %v1103 = vmax.f32 %v868, 0.0
        %v1104 = vmax.f32 %v870, 0.0
        %v1105 = vmax.f32 %v999, 0.0
        %v1106 = vmax.f32 %v1001, 0.0
        %v1107 = vmax.f32 %v741, 0.0
        %v1108 = vmax.f32 %v743, 0.0
        %v1109 = vmax.f32 %v872, 0.0
        %v1110 = vmax.f32 %v874, 0.0
        %v1111 = vmax.f32 %v1003, 0.0
        %v1112 = vmax.f32 %v1005, 0.0
        %v1113 = vmax.f32 %v747, 0.0
        %v1114 = vmax.f32 %v749, 0.0
        %v1115 = vmax.f32 %v878, 0.0
        %v1116 = vmax.f32 %v880, 0.0
        %v1117 = vmax.f32 %v1009, 0.0
        %v1118 = vmax.f32 %v1011, 0.0
        %v1119 = vmax.f32 %v751, 0.0
        %v1120 = vmax.f32 %v753, 0.0
        %v1121 = vmax.f32 %v882, 0.0
        %v1122 = vmax.f32 %v884, 0.0
        %v1123 = vmax.f32 %v1013, 0.0
        %v1124 = vmax.f32 %v1015, 0.0
        %v1125 = vmax.f32 %v757, 0.0
        %v1126 = vmax.f32 %v759, 0.0
        %v1127 = vmax.f32 %v888, 0.0
        %v1128 = vmax.f32 %v890, 0.0
        %v1129 = vmax.f32 %v1019, 0.0
        %v1130 = vmax.f32 %v1021, 0.0
        %v1131 = vmax.f32 %v761, 0.0
        %v1132 = vmax.f32 %v763, 0.0
        %v1133 = vmax.f32 %v892, 0.0
        %v1134 = vmax.f32 %v894, 0.0
        %v1135 = vmax.f32 %v1023, 0.0
        %v1136 = vmax.f32 %v1025, 0.0
        %v1137 = vmax.f32 %v767, 0.0
        %v1138 = vmax.f32 %v769, 0.0
        %v1139 = vmax.f32 %v898, 0.0
        %v1140 = vmax.f32 %v900, 0.0
        %v1141 = vmax.f32 %v1029, 0.0
        %v1142 = vmax.f32 %v1031, 0.0
        %v1143 = vmax.f32 %v771, 0.0
        %v1144 = vmax.f32 %v773, 0.0
        %v1145 = vmax.f32 %v902, 0.0
        %v1146 = vmax.f32 %v904, 0.0
        %v1147 = vmax.f32 %v1033, 0.0
        %v1148 = vmax.f32 %v1035, 0.0
        %v1149 = vmax.f32 %v777, 0.0
        %v1150 = vmax.f32 %v779, 0.0
        %v1151 = vmax.f32 %v908, 0.0
        %v1152 = vmax.f32 %v910, 0.0
        %v1153 = vmax.f32 %v1039, 0.0
        %v1154 = vmax.f32 %v1041, 0.0
        %v1155 = vmax.f32 %v781, 0.0
        %v1156 = vmax.f32 %v783, 0.0
        %v1157 = vmax.f32 %v912, 0.0
        %v1158 = vmax.f32 %v914, 0.0
        %v1159 = vmax.f32 %v1043, 0.0
        %v1160 = vmax.f32 %v1045, 0.0
        %v1161 = vmax.f32 %v787, 0.0
        %v1162 = vmax.f32 %v789, 0.0
        %v1163 = vmax.f32 %v918, 0.0
        %v1164 = vmax.f32 %v920, 0.0
        %v1165 = vmax.f32 %v1049, 0.0
        %v1166 = vmax.f32 %v1051, 0.0
        %v1167 = vmax.f32 %v791, 0.0
        %v1168 = vmax.f32 %v793, 0.0
        %v1169 = vmax.f32 %v922, 0.0
        %v1170 = vmax.f32 %v924, 0.0
        %v1171 = vmax.f32 %v1053, 0.0
        %v1172 = vmax.f32 %v1055, 0.0
        %v1173 = vmax.f32 %v797, 0.0
        %v1174 = vmax.f32 %v799, 0.0
        %v1175 = vmax.f32 %v928, 0.0
        %v1176 = vmax.f32 %v930, 0.0
        %v1177 = vmax.f32 %v1059, 0.0
        %v1178 = vmax.f32 %v1061, 0.0
        %v1179 = vpack.c.bf16 %v1071, %v1065
        %v1180 = vpack.c.bf16 %v1072, %v1066
        %v1181 = vpack.c.bf16 %v1073, %v1067
        %v1182 = vpack.c.bf16 %v1074, %v1068
        %v1183 = vpack.c.bf16 %v1075, %v1069
        %v1184 = vpack.c.bf16 %v1076, %v1070
        %v1185 = vpack.c.bf16 %v1083, %v1077
        %v1186 = vpack.c.bf16 %v1084, %v1078
        %v1187 = vpack.c.bf16 %v1085, %v1079
        %v1188 = vpack.c.bf16 %v1086, %v1080
        %v1189 = vpack.c.bf16 %v1087, %v1081
        %v1190 = vpack.c.bf16 %v1088, %v1082
        %v1191 = vpack.c.bf16 %v1095, %v1089
        %v1192 = vpack.c.bf16 %v1096, %v1090
        %v1193 = vpack.c.bf16 %v1097, %v1091
        %v1194 = vpack.c.bf16 %v1098, %v1092
        %v1195 = vpack.c.bf16 %v1099, %v1093
        %v1196 = vpack.c.bf16 %v1100, %v1094
        %v1197 = vpack.c.bf16 %v1107, %v1101
        %v1198 = vpack.c.bf16 %v1108, %v1102
        %v1199 = vpack.c.bf16 %v1109, %v1103
        %v1200 = vpack.c.bf16 %v1110, %v1104
        %v1201 = vpack.c.bf16 %v1111, %v1105
        %v1202 = vpack.c.bf16 %v1112, %v1106
        %v1203 = vpack.c.bf16 %v1119, %v1113
        %v1204 = vpack.c.bf16 %v1120, %v1114
        %v1205 = vpack.c.bf16 %v1121, %v1115
        %v1206 = vpack.c.bf16 %v1122, %v1116
        %v1207 = vpack.c.bf16 %v1123, %v1117
        %v1208 = vpack.c.bf16 %v1124, %v1118
        %v1209 = vpack.c.bf16 %v1131, %v1125
        %v1210 = vpack.c.bf16 %v1132, %v1126
        %v1211 = vpack.c.bf16 %v1133, %v1127
        %v1212 = vpack.c.bf16 %v1134, %v1128
        %v1213 = vpack.c.bf16 %v1135, %v1129
        %v1214 = vpack.c.bf16 %v1136, %v1130
        %v1215 = vpack.c.bf16 %v1143, %v1137
        %v1216 = vpack.c.bf16 %v1144, %v1138
        %v1217 = vpack.c.bf16 %v1145, %v1139
        %v1218 = vpack.c.bf16 %v1146, %v1140
        %v1219 = vpack.c.bf16 %v1147, %v1141
        %v1220 = vpack.c.bf16 %v1148, %v1142
        %v1221 = vpack.c.bf16 %v1155, %v1149
        %v1222 = vpack.c.bf16 %v1156, %v1150
        %v1223 = vpack.c.bf16 %v1157, %v1151
        %v1224 = vpack.c.bf16 %v1158, %v1152
        %v1225 = vpack.c.bf16 %v1159, %v1153
        %v1226 = vpack.c.bf16 %v1160, %v1154
        %v1227 = vpack.c.bf16 %v1167, %v1161
        %v1228 = vpack.c.bf16 %v1168, %v1162
        %v1229 = vpack.c.bf16 %v1169, %v1163
        %v1230 = vpack.c.bf16 %v1170, %v1164
        %v1231 = vpack.c.bf16 %v1171, %v1165
        %v1232 = vpack.c.bf16 %v1172, %v1166
        %v1233 = vpack.c.bf16 %v1173, %v1173
        %v1234 = vpack.c.bf16 %v1174, %v1174
        %v1235 = vpack.c.bf16 %v1175, %v1175
        %v1236 = vpack.c.bf16 %v1176, %v1176
        %v1237 = vpack.c.bf16 %v1177, %v1177
        %v1238 = vpack.c.bf16 %v1178, %v1178
        %v1239 = vld [vmem:[#allocation7] sm:$0xf]
        %v1240 = vld [vmem:[#allocation7 + $0x4] sm:$0xf]
        %v1241 = vld [vmem:[#allocation7 + $0x8] sm:$0xf]
        %v1242 = vld [vmem:[#allocation7 + $0xc] sm:$0xf]
        %v1243 = vld [vmem:[#allocation7 + $0x10] sm:$0xf]
        %v1244 = vld [vmem:[#allocation7 + $0x14] sm:$0xf]
        %v1245 = vld [vmem:[#allocation7 + $0x18] sm:$0xf]
        %v1246 = vld [vmem:[#allocation7 + $0x1c] sm:$0xf]
        %v1247 = vld [vmem:[#allocation7 + $0x20] sm:$0xf]
        %v1248 = vld [vmem:[#allocation7 + $0x24] sm:$0xf]
        %v1249 = vld [vmem:[#allocation7 + $0x28] sm:$0xf]
        %v1250 = vld [vmem:[#allocation7 + $0x2c] sm:$0xf]
        %v1251 = vld [vmem:[#allocation7 + $0x30] sm:$0xf]
        %v1252 = vld [vmem:[#allocation7 + $0x34] sm:$0xf]
        %v1253 = vld [vmem:[#allocation7 + $0x38] sm:$0xf]
        %v1254 = vld [vmem:[#allocation7 + $0x3c] sm:$0xf]
        %v1255 = vld [vmem:[#allocation7 + $0x40] sm:$0xf]
        %v1256 = vld [vmem:[#allocation7 + $0x44] sm:$0xf]
        %v1257 = vld [vmem:[#allocation7 + $0x48] sm:$0xf]
        %v1258 = vld [vmem:[#allocation7 + $0x4c] sm:$0xf]
        %v1259 = vld [vmem:[#allocation7 + $0x50] sm:$0xf]
        %v1260 = vld [vmem:[#allocation7 + $0x54] sm:$0xf]
        %v1261 = vld [vmem:[#allocation7 + $0x58] sm:$0xf]
        %v1262 = vld [vmem:[#allocation7 + $0x5c] sm:$0xf]
        %v1263 = vld [vmem:[#allocation7 + $0x60] sm:$0xf]
        %v1264 = vld [vmem:[#allocation7 + $0x64] sm:$0xf]
        %v1265 = vld [vmem:[#allocation7 + $0x68] sm:$0xf]
        %v1266 = vld [vmem:[#allocation7 + $0x6c] sm:$0xf]
        %v1267 = vld [vmem:[#allocation7 + $0x70] sm:$0xf]
        %v1268 = vld [vmem:[#allocation7 + $0x74] sm:$0xf]
        %v1269 = vld [vmem:[#allocation7 + $0x78] sm:$0xf]
        %v1270 = vld [vmem:[#allocation7 + $0x7c] sm:$0xf]
        %v1271 = vld [vmem:[#allocation7 + $0x80] sm:$0xf]
        %v1272 = vld [vmem:[#allocation7 + $0x84] sm:$0xf]
        %v1273 = vld [vmem:[#allocation7 + $0x88] sm:$0xf]
        %v1274 = vld [vmem:[#allocation7 + $0x8c] sm:$0xf]
        %v1275 = vld [vmem:[#allocation7 + $0x90] sm:$0xf]
        %v1276 = vld [vmem:[#allocation7 + $0x94] sm:$0xf]
        %v1277 = vld [vmem:[#allocation7 + $0x98] sm:$0xf]
        %v1278 = vld [vmem:[#allocation7 + $0x9c] sm:$0xf]
        %v1279 = vld [vmem:[#allocation7 + $0xa0] sm:$0xf]
        %v1280 = vld [vmem:[#allocation7 + $0xa4] sm:$0xf]
        %v1281 = vld [vmem:[#allocation7 + $0xa8] sm:$0xf]
        %v1282 = vld [vmem:[#allocation7 + $0xac] sm:$0xf]
        %v1283 = vld [vmem:[#allocation7 + $0xb0] sm:$0xf]
        %v1284 = vld [vmem:[#allocation7 + $0xb4] sm:$0xf]
        %v1285 = vld [vmem:[#allocation7 + $0xb8] sm:$0xf]
        %v1286 = vld [vmem:[#allocation7 + $0xbc] sm:$0xf]
        %v1287 = vld [vmem:[#allocation7 + $0xc0] sm:$0xf]
        %v1288 = vld [vmem:[#allocation7 + $0xc4] sm:$0xf]
        %v1289 = vld [vmem:[#allocation7 + $0xc8] sm:$0xf]
        %v1290 = vld [vmem:[#allocation7 + $0xcc] sm:$0xf]
        %v1291 = vld [vmem:[#allocation7 + $0xd0] sm:$0xf]
        %v1292 = vld [vmem:[#allocation7 + $0xd4] sm:$0xf]
        %v1293 = vld [vmem:[#allocation7 + $0xd8] sm:$0xf]
        %v1294 = vld [vmem:[#allocation7 + $0xdc] sm:$0xf]
        %v1295 = vld [vmem:[#allocation7 + $0xe0] sm:$0xf]
        %v1296 = vld [vmem:[#allocation7 + $0xe4] sm:$0xf]
        %v1297 = vld [vmem:[#allocation7 + $0xe8] sm:$0xf]
        %v1298 = vld [vmem:[#allocation7 + $0xec] sm:$0xf]
        %v1299 = vld [vmem:[#allocation7 + $0xf0] sm:$0xf]
        %v1300 = vld [vmem:[#allocation7 + $0xf4] sm:$0xf]
        %v1301 = vld [vmem:[#allocation7 + $0xf8] sm:$0xf]
        %v1302 = vld [vmem:[#allocation7 + $0xfc] sm:$0xf]
        %v1303 = vld [vmem:[#allocation7 + $0x100] sm:$0xf]
        %v1304 = vld [vmem:[#allocation7 + $0x104] sm:$0xf]
        %v1305 = vld [vmem:[#allocation7 + $0x108] sm:$0xf]
        %v1306 = vld [vmem:[#allocation7 + $0x10c] sm:$0xf]
        %v1307 = vld [vmem:[#allocation7 + $0x110] sm:$0xf]
        %v1308 = vld [vmem:[#allocation7 + $0x114] sm:$0xf]
        %v1309 = vld [vmem:[#allocation7 + $0x118] sm:$0xf]
        %v1310 = vld [vmem:[#allocation7 + $0x11c] sm:$0xf]
        %v1311 = vld [vmem:[#allocation7 + $0x120] sm:$0xf]
        %v1312 = vld [vmem:[#allocation7 + $0x124] sm:$0xf]
        %v1313 = vld [vmem:[#allocation7 + $0x128] sm:$0xf]
        %v1314 = vld [vmem:[#allocation7 + $0x12c] sm:$0xf]
        %v1315 = vld [vmem:[#allocation7 + $0x130] sm:$0xf]
        %v1316 = vld [vmem:[#allocation7 + $0x134] sm:$0xf]
        %v1317 = vld [vmem:[#allocation7 + $0x138] sm:$0xf]
        %v1318 = vld [vmem:[#allocation7 + $0x13c] sm:$0xf]
        %v1319 = vld [vmem:[#allocation7 + $0x140] sm:$0xf]
        %v1320 = vld [vmem:[#allocation7 + $0x144] sm:$0xf]
        %v1321 = vld [vmem:[#allocation7 + $0x148] sm:$0xf]
        %v1322 = vld [vmem:[#allocation7 + $0x14c] sm:$0xf]
        %v1323 = vld [vmem:[#allocation7 + $0x150] sm:$0xf]
        %v1324 = vld [vmem:[#allocation7 + $0x154] sm:$0xf]
        %v1325 = vld [vmem:[#allocation7 + $0x158] sm:$0xf]
        %v1326 = vld [vmem:[#allocation7 + $0x15c] sm:$0xf]
        %v1327 = vld [vmem:[#allocation7 + $0x160] sm:$0xf]
        %v1328 = vld [vmem:[#allocation7 + $0x164] sm:$0xf]
        %v1329 = vld [vmem:[#allocation7 + $0x168] sm:$0xf]
        %v1330 = vld [vmem:[#allocation7 + $0x16c] sm:$0xf]
        %v1331 = vld [vmem:[#allocation7 + $0x170] sm:$0xf]
        %v1332 = vld [vmem:[#allocation7 + $0x174] sm:$0xf]
        %v1333 = vld [vmem:[#allocation7 + $0x178] sm:$0xf]
        %v1334 = vld [vmem:[#allocation7 + $0x17c] sm:$0xf]
        %v1335 = vld [vmem:[%s4] sm:$0x1]
        %v1337 = vlaneseq
        %v1338 = vshrl.u32 %v1337, 7
        %v1339 = vsub.s32 0, %v1338
        %v1340 = vrot.slane %v1335, %v1339
        %v1438 = vunpack.c.l.b16 %v1239
        %v1439 = vunpack.c.l.b16 %v1240
        %v1440 = vunpack.c.l.b16 %v1241
        %v1441 = vunpack.c.l.b16 %v1242
        %v1442 = vunpack.c.l.b16 %v1243
        %v1443 = vunpack.c.l.b16 %v1244
        %v1444 = vunpack.c.l.b16 %v1245
        %v1445 = vunpack.c.l.b16 %v1246
        %v1446 = vunpack.c.l.b16 %v1247
        %v1447 = vunpack.c.l.b16 %v1248
        %v1448 = vunpack.c.l.b16 %v1249
        %v1449 = vunpack.c.l.b16 %v1250
        %v1450 = vunpack.c.l.b16 %v1251
        %v1451 = vunpack.c.l.b16 %v1252
        %v1452 = vunpack.c.l.b16 %v1253
        %v1453 = vunpack.c.l.b16 %v1254
        %v1454 = vunpack.c.l.b16 %v1255
        %v1455 = vunpack.c.l.b16 %v1256
        %v1456 = vunpack.c.l.b16 %v1257
        %v1457 = vunpack.c.l.b16 %v1258
        %v1458 = vunpack.c.l.b16 %v1259
        %v1459 = vunpack.c.l.b16 %v1260
        %v1460 = vunpack.c.l.b16 %v1261
        %v1461 = vunpack.c.l.b16 %v1262
        %v1462 = vunpack.c.l.b16 %v1263
        %v1463 = vunpack.c.l.b16 %v1264
        %v1464 = vunpack.c.l.b16 %v1265
        %v1465 = vunpack.c.l.b16 %v1266
        %v1466 = vunpack.c.l.b16 %v1267
        %v1467 = vunpack.c.l.b16 %v1268
        %v1468 = vunpack.c.l.b16 %v1269
        %v1469 = vunpack.c.l.b16 %v1270
        %v1470 = vunpack.c.l.b16 %v1271
        %v1471 = vunpack.c.l.b16 %v1272
        %v1472 = vunpack.c.l.b16 %v1273
        %v1473 = vunpack.c.l.b16 %v1274
        %v1474 = vunpack.c.l.b16 %v1275
        %v1475 = vunpack.c.l.b16 %v1276
        %v1476 = vunpack.c.l.b16 %v1277
        %v1477 = vunpack.c.l.b16 %v1278
        %v1478 = vunpack.c.l.b16 %v1279
        %v1479 = vunpack.c.l.b16 %v1280
        %v1480 = vunpack.c.l.b16 %v1281
        %v1481 = vunpack.c.l.b16 %v1282
        %v1482 = vunpack.c.l.b16 %v1283
        %v1483 = vunpack.c.l.b16 %v1284
        %v1484 = vunpack.c.l.b16 %v1285
        %v1485 = vunpack.c.l.b16 %v1286
        %v1486 = vunpack.c.l.b16 %v1287
        %v1487 = vunpack.c.l.b16 %v1288
        %v1488 = vunpack.c.l.b16 %v1289
        %v1489 = vunpack.c.l.b16 %v1290
        %v1490 = vunpack.c.l.b16 %v1291
        %v1491 = vunpack.c.l.b16 %v1292
        %v1492 = vunpack.c.l.b16 %v1293
        %v1493 = vunpack.c.l.b16 %v1294
        %v1494 = vunpack.c.l.b16 %v1295
        %v1495 = vunpack.c.l.b16 %v1296
        %v1496 = vunpack.c.l.b16 %v1297
        %v1497 = vunpack.c.l.b16 %v1298
        %v1498 = vunpack.c.l.b16 %v1299
        %v1499 = vunpack.c.l.b16 %v1300
        %v1500 = vunpack.c.l.b16 %v1301
        %v1501 = vunpack.c.l.b16 %v1302
        %v1502 = vunpack.c.l.b16 %v1303
        %v1503 = vunpack.c.l.b16 %v1304
        %v1504 = vunpack.c.l.b16 %v1305
        %v1505 = vunpack.c.l.b16 %v1306
        %v1506 = vunpack.c.l.b16 %v1307
        %v1507 = vunpack.c.l.b16 %v1308
        %v1508 = vunpack.c.l.b16 %v1309
        %v1509 = vunpack.c.l.b16 %v1310
        %v1510 = vunpack.c.l.b16 %v1311
        %v1511 = vunpack.c.l.b16 %v1312
        %v1512 = vunpack.c.l.b16 %v1313
        %v1513 = vunpack.c.l.b16 %v1314
        %v1514 = vunpack.c.l.b16 %v1315
        %v1515 = vunpack.c.l.b16 %v1316
        %v1516 = vunpack.c.l.b16 %v1317
        %v1517 = vunpack.c.l.b16 %v1318
        %v1518 = vunpack.c.l.b16 %v1319
        %v1519 = vunpack.c.l.b16 %v1320
        %v1520 = vunpack.c.l.b16 %v1321
        %v1521 = vunpack.c.l.b16 %v1322
        %v1522 = vunpack.c.l.b16 %v1323
        %v1523 = vunpack.c.l.b16 %v1324
        %v1524 = vunpack.c.l.b16 %v1325
        %v1525 = vunpack.c.l.b16 %v1326
        %v1526 = vunpack.c.l.b16 %v1327
        %v1527 = vunpack.c.l.b16 %v1328
        %v1528 = vunpack.c.l.b16 %v1329
        %v1529 = vunpack.c.l.b16 %v1330
        %v1530 = vunpack.c.l.b16 %v1331
        %v1531 = vunpack.c.l.b16 %v1332
        %v1532 = vunpack.c.l.b16 %v1333
        %v1533 = vunpack.c.l.b16 %v1334
        %v1534 = vpack.c.b16 %v1439, %v1438
        %v1535 = vpack.c.b16 %v1441, %v1440
        %v1536 = vpack.c.b16 %v1443, %v1442
        %v1537 = vpack.c.b16 %v1445, %v1444
        %v1538 = vpack.c.b16 %v1447, %v1446
        %v1539 = vpack.c.b16 %v1449, %v1448
        %v1540 = vpack.c.b16 %v1451, %v1450
        %v1541 = vpack.c.b16 %v1453, %v1452
        %v1542 = vpack.c.b16 %v1455, %v1454
        %v1543 = vpack.c.b16 %v1457, %v1456
        %v1544 = vpack.c.b16 %v1459, %v1458
        %v1545 = vpack.c.b16 %v1461, %v1460
        %v1546 = vpack.c.b16 %v1463, %v1462
        %v1547 = vpack.c.b16 %v1465, %v1464
        %v1548 = vpack.c.b16 %v1467, %v1466
        %v1549 = vpack.c.b16 %v1469, %v1468
        %v1550 = vpack.c.b16 %v1471, %v1470
        %v1551 = vpack.c.b16 %v1473, %v1472
        %v1552 = vpack.c.b16 %v1475, %v1474
        %v1553 = vpack.c.b16 %v1477, %v1476
        %v1554 = vpack.c.b16 %v1479, %v1478
        %v1555 = vpack.c.b16 %v1481, %v1480
        %v1556 = vpack.c.b16 %v1483, %v1482
        %v1557 = vpack.c.b16 %v1485, %v1484
        %v1558 = vpack.c.b16 %v1487, %v1486
        %v1559 = vpack.c.b16 %v1489, %v1488
        %v1560 = vpack.c.b16 %v1491, %v1490
        %v1561 = vpack.c.b16 %v1493, %v1492
        %v1562 = vpack.c.b16 %v1495, %v1494
        %v1563 = vpack.c.b16 %v1497, %v1496
        %v1564 = vpack.c.b16 %v1499, %v1498
        %v1565 = vpack.c.b16 %v1501, %v1500
        %v1566 = vpack.c.b16 %v1503, %v1502
        %v1567 = vpack.c.b16 %v1505, %v1504
        %v1568 = vpack.c.b16 %v1507, %v1506
        %v1569 = vpack.c.b16 %v1509, %v1508
        %v1570 = vpack.c.b16 %v1511, %v1510
        %v1571 = vpack.c.b16 %v1513, %v1512
        %v1572 = vpack.c.b16 %v1515, %v1514
        %v1573 = vpack.c.b16 %v1517, %v1516
        %v1574 = vpack.c.b16 %v1519, %v1518
        %v1575 = vpack.c.b16 %v1521, %v1520
        %v1576 = vpack.c.b16 %v1523, %v1522
        %v1577 = vpack.c.b16 %v1525, %v1524
        %v1578 = vpack.c.b16 %v1527, %v1526
        %v1579 = vpack.c.b16 %v1529, %v1528
        %v1580 = vpack.c.b16 %v1531, %v1530
        %v1581 = vpack.c.b16 %v1533, %v1532
        %1630 = vmatprep.subr.bf16.mxu0 0
        %1631 = vmatpush1.bf16.msra.mxu0 %v1534
        %1632 = vmatprep.subr.bf16.mxu0 0
        %1633 = vmatpush1.bf16.msra.mxu0 %v1535
        %1634 = vmatprep.subr.bf16.mxu0 0
        %1635 = vmatpush1.bf16.msra.mxu0 %v1536
        %1636 = vmatprep.subr.bf16.mxu0 0
        %1637 = vmatpush1.bf16.msra.mxu0 %v1537
        %1638 = vmatprep.subr.bf16.mxu0 0
        %1639 = vmatpush1.bf16.msra.mxu0 %v1538
        %1640 = vmatprep.subr.bf16.mxu0 0
        %1641 = vmatpush1.bf16.msra.mxu0 %v1539
        %1642 = vmatprep.subr.bf16.mxu0 0
        %1643 = vmatpush1.bf16.msra.mxu0 %v1540
        %1644 = vmatprep.subr.bf16.mxu0 0
        %1645 = vmatpush1.bf16.msra.mxu0 %v1541
        %1646 = vmatprep.subr.bf16.mxu0 0
        %1647 = vmatpush1.bf16.msra.mxu0 %v1542
        %1648 = vmatprep.subr.bf16.mxu0 0
        %1649 = vmatpush1.bf16.msra.mxu0 %v1543
        %1650 = vmatprep.subr.bf16.mxu0 0
        %1651 = vmatpush1.bf16.msra.mxu0 %v1544
        %1652 = vmatprep.subr.bf16.mxu0 0
        %1653 = vmatpush1.bf16.msra.mxu0 %v1545
        %1654 = vmatprep.subr.bf16.mxu0 0
        %1655 = vmatpush1.bf16.msra.mxu0 %v1546
        %1656 = vmatprep.subr.bf16.mxu0 0
        %1657 = vmatpush1.bf16.msra.mxu0 %v1547
        %1658 = vmatprep.subr.bf16.mxu0 0
        %1659 = vmatpush1.bf16.msra.mxu0 %v1548
        %1660 = vmatprep.subr.bf16.mxu0 0
        %1661 = vmatpush1.bf16.msra.mxu0 %v1549
        %1662 = vmatprep.mubr.bf16.mxu0 %v1180
        %1663 = vmatmul.mubr.bf16.gmra.mrb[0].mxu0 %v1179
        %v1664 = vpop.f32.mrb[0].mxu0
        %v1665 = vadd.f32 %v1340, %v1664
        %v1666 = vpop.f32.mrb[0].mxu0
        %v1667 = vpop.f32.mrb[0].mxu0
        %v1668 = vadd.f32 %v1340, %v1667
        %v1669 = vpop.f32.mrb[0].mxu0
        %1670 = vmatprep.mubr.bf16.mxu0 %v1186
        %1671 = vmatmul.mubr.bf16.gmra.mrb[0].mxu0 %v1185
        %v1672 = vpop.f32.mrb[0].mxu0
        %v1673 = vadd.f32 %v1340, %v1672
        %v1674 = vpop.f32.mrb[0].mxu0
        %v1675 = vpop.f32.mrb[0].mxu0
        %v1676 = vadd.f32 %v1340, %v1675
        %v1677 = vpop.f32.mrb[0].mxu0
        %1678 = vmatprep.mubr.bf16.mxu0 %v1192
        %1679 = vmatmul.mubr.bf16.gmra.mrb[0].mxu0 %v1191
        %v1680 = vpop.f32.mrb[0].mxu0
        %v1681 = vadd.f32 %v1340, %v1680
        %v1682 = vpop.f32.mrb[0].mxu0
        %v1683 = vpop.f32.mrb[0].mxu0
        %v1684 = vadd.f32 %v1340, %v1683
        %v1685 = vpop.f32.mrb[0].mxu0
        %1686 = vmatprep.mubr.bf16.mxu0 %v1198
        %1687 = vmatmul.mubr.bf16.gmra.mrb[0].mxu0 %v1197
        %v1688 = vpop.f32.mrb[0].mxu0
        %v1689 = vadd.f32 %v1340, %v1688
        %v1690 = vpop.f32.mrb[0].mxu0
        %v1691 = vpop.f32.mrb[0].mxu0
        %v1692 = vadd.f32 %v1340, %v1691
        %v1693 = vpop.f32.mrb[0].mxu0
        %1694 = vmatprep.mubr.bf16.mxu0 %v1204
        %1695 = vmatmul.mubr.bf16.gmra.mrb[0].mxu0 %v1203
        %v1696 = vpop.f32.mrb[0].mxu0
        %v1697 = vadd.f32 %v1340, %v1696
        %v1698 = vpop.f32.mrb[0].mxu0
        %v1699 = vpop.f32.mrb[0].mxu0
        %v1700 = vadd.f32 %v1340, %v1699
        %v1701 = vpop.f32.mrb[0].mxu0
        %1702 = vmatprep.mubr.bf16.mxu0 %v1210
        %1703 = vmatmul.mubr.bf16.gmra.mrb[0].mxu0 %v1209
        %v1704 = vpop.f32.mrb[0].mxu0
        %v1705 = vadd.f32 %v1340, %v1704
        %v1706 = vpop.f32.mrb[0].mxu0
        %v1707 = vpop.f32.mrb[0].mxu0
        %v1708 = vadd.f32 %v1340, %v1707
        %v1709 = vpop.f32.mrb[0].mxu0
        %1710 = vmatprep.mubr.bf16.mxu0 %v1216
        %1711 = vmatmul.mubr.bf16.gmra.mrb[0].mxu0 %v1215
        %v1712 = vpop.f32.mrb[0].mxu0
        %v1713 = vadd.f32 %v1340, %v1712
        %v1714 = vpop.f32.mrb[0].mxu0
        %v1715 = vpop.f32.mrb[0].mxu0
        %v1716 = vadd.f32 %v1340, %v1715
        %v1717 = vpop.f32.mrb[0].mxu0
        %1718 = vmatprep.mubr.bf16.mxu0 %v1222
        %1719 = vmatmul.mubr.bf16.gmra.mrb[0].mxu0 %v1221
        %v1720 = vpop.f32.mrb[0].mxu0
        %v1721 = vadd.f32 %v1340, %v1720
        %v1722 = vpop.f32.mrb[0].mxu0
        %v1723 = vpop.f32.mrb[0].mxu0
        %v1724 = vadd.f32 %v1340, %v1723
        %v1725 = vpop.f32.mrb[0].mxu0
        %1726 = vmatprep.mubr.bf16.mxu0 %v1228
        %1727 = vmatmul.mubr.bf16.gmra.mrb[0].mxu0 %v1227
        %v1728 = vpop.f32.mrb[0].mxu0
        %v1729 = vadd.f32 %v1340, %v1728
        %v1730 = vpop.f32.mrb[0].mxu0
        %v1731 = vpop.f32.mrb[0].mxu0
        %v1732 = vadd.f32 %v1340, %v1731
        %v1733 = vpop.f32.mrb[0].mxu0
        %1734 = vmatprep.mubr.bf16.mxu0 %v1234
        %1735 = vmatmul.mubr.bf16.gmra.mrb[0].mxu0 %v1233
        %v1736 = vpop.f32.mrb[0].mxu0
        %v1737 = vadd.f32 %v1340, %v1736
        %v1738 = vpop.f32.mrb[0].mxu0
        %v1739 = vpop.f32.mrb[0].mxu0
        %v1740 = vpop.f32.mrb[0].mxu0
        %1741 = vdwg.mxu0
        %1742 = vmatprep.subr.bf16.mxu0 0
        %1743 = vmatpush1.bf16.msra.mxu0 %v1550
        %1744 = vmatprep.subr.bf16.mxu0 0
        %1745 = vmatpush1.bf16.msra.mxu0 %v1551
        %1746 = vmatprep.subr.bf16.mxu0 0
        %1747 = vmatpush1.bf16.msra.mxu0 %v1552
        %1748 = vmatprep.subr.bf16.mxu0 0
        %1749 = vmatpush1.bf16.msra.mxu0 %v1553
        %1750 = vmatprep.subr.bf16.mxu0 0
        %1751 = vmatpush1.bf16.msra.mxu0 %v1554
        %1752 = vmatprep.subr.bf16.mxu0 0
        %1753 = vmatpush1.bf16.msra.mxu0 %v1555
        %1754 = vmatprep.subr.bf16.mxu0 0
        %1755 = vmatpush1.bf16.msra.mxu0 %v1556
        %1756 = vmatprep.subr.bf16.mxu0 0
        %1757 = vmatpush1.bf16.msra.mxu0 %v1557
        %1758 = vmatprep.subr.bf16.mxu0 0
        %1759 = vmatpush1.bf16.msra.mxu0 %v1558
        %1760 = vmatprep.subr.bf16.mxu0 0
        %1761 = vmatpush1.bf16.msra.mxu0 %v1559
        %1762 = vmatprep.subr.bf16.mxu0 0
        %1763 = vmatpush1.bf16.msra.mxu0 %v1560
        %1764 = vmatprep.subr.bf16.mxu0 0
        %1765 = vmatpush1.bf16.msra.mxu0 %v1561
        %1766 = vmatprep.subr.bf16.mxu0 0
        %1767 = vmatpush1.bf16.msra.mxu0 %v1562
        %1768 = vmatprep.subr.bf16.mxu0 0
        %1769 = vmatpush1.bf16.msra.mxu0 %v1563
        %1770 = vmatprep.subr.bf16.mxu0 0
        %1771 = vmatpush1.bf16.msra.mxu0 %v1564
        %1772 = vmatprep.subr.bf16.mxu0 0
        %1773 = vmatpush1.bf16.msra.mxu0 %v1565
        %1774 = vmatprep.mubr.bf16.mxu0 %v1182
        %1775 = vmatmul.mubr.bf16.gmra.mrb[0].mxu0 %v1181
        %v1776 = vpop.f32.mrb[0].mxu0
        %v1777 = vadd.f32 %v1665, %v1776
        %v1778 = vpop.f32.mrb[0].mxu0
        %v1779 = vpop.f32.mrb[0].mxu0
        %v1780 = vadd.f32 %v1668, %v1779
        %v1781 = vpop.f32.mrb[0].mxu0
        %1782 = vmatprep.mubr.bf16.mxu0 %v1188
        %1783 = vmatmul.mubr.bf16.gmra.mrb[0].mxu0 %v1187
        %v1784 = vpop.f32.mrb[0].mxu0
        %v1785 = vadd.f32 %v1673, %v1784
        %v1786 = vpop.f32.mrb[0].mxu0
        %v1787 = vpop.f32.mrb[0].mxu0
        %v1788 = vadd.f32 %v1676, %v1787
        %v1789 = vpop.f32.mrb[0].mxu0
        %1790 = vmatprep.mubr.bf16.mxu0 %v1194
        %1791 = vmatmul.mubr.bf16.gmra.mrb[0].mxu0 %v1193
        %v1792 = vpop.f32.mrb[0].mxu0
        %v1793 = vadd.f32 %v1681, %v1792
        %v1794 = vpop.f32.mrb[0].mxu0
        %v1795 = vpop.f32.mrb[0].mxu0
        %v1796 = vadd.f32 %v1684, %v1795
        %v1797 = vpop.f32.mrb[0].mxu0
        %1798 = vmatprep.mubr.bf16.mxu0 %v1200
        %1799 = vmatmul.mubr.bf16.gmra.mrb[0].mxu0 %v1199
        %v1800 = vpop.f32.mrb[0].mxu0
        %v1801 = vadd.f32 %v1689, %v1800
        %v1802 = vpop.f32.mrb[0].mxu0
        %v1803 = vpop.f32.mrb[0].mxu0
        %v1804 = vadd.f32 %v1692, %v1803
        %v1805 = vpop.f32.mrb[0].mxu0
        %1806 = vmatprep.mubr.bf16.mxu0 %v1206
        %1807 = vmatmul.mubr.bf16.gmra.mrb[0].mxu0 %v1205
        %v1808 = vpop.f32.mrb[0].mxu0
        %v1809 = vadd.f32 %v1697, %v1808
        %v1810 = vpop.f32.mrb[0].mxu0
        %v1811 = vpop.f32.mrb[0].mxu0
        %v1812 = vadd.f32 %v1700, %v1811
        %v1813 = vpop.f32.mrb[0].mxu0
        %1814 = vmatprep.mubr.bf16.mxu0 %v1212
        %1815 = vmatmul.mubr.bf16.gmra.mrb[0].mxu0 %v1211
        %v1816 = vpop.f32.mrb[0].mxu0
        %v1817 = vadd.f32 %v1705, %v1816
        %v1818 = vpop.f32.mrb[0].mxu0
        %v1819 = vpop.f32.mrb[0].mxu0
        %v1820 = vadd.f32 %v1708, %v1819
        %v1821 = vpop.f32.mrb[0].mxu0
        %1822 = vmatprep.mubr.bf16.mxu0 %v1218
        %1823 = vmatmul.mubr.bf16.gmra.mrb[0].mxu0 %v1217
        %v1824 = vpop.f32.mrb[0].mxu0
        %v1825 = vadd.f32 %v1713, %v1824
        %v1826 = vpop.f32.mrb[0].mxu0
        %v1827 = vpop.f32.mrb[0].mxu0
        %v1828 = vadd.f32 %v1716, %v1827
        %v1829 = vpop.f32.mrb[0].mxu0
        %1830 = vmatprep.mubr.bf16.mxu0 %v1224
        %1831 = vmatmul.mubr.bf16.gmra.mrb[0].mxu0 %v1223
        %v1832 = vpop.f32.mrb[0].mxu0
        %v1833 = vadd.f32 %v1721, %v1832
        %v1834 = vpop.f32.mrb[0].mxu0
        %v1835 = vpop.f32.mrb[0].mxu0
        %v1836 = vadd.f32 %v1724, %v1835
        %v1837 = vpop.f32.mrb[0].mxu0
        %1838 = vmatprep.mubr.bf16.mxu0 %v1230
        %1839 = vmatmul.mubr.bf16.gmra.mrb[0].mxu0 %v1229
        %v1840 = vpop.f32.mrb[0].mxu0
        %v1841 = vadd.f32 %v1729, %v1840
        %v1842 = vpop.f32.mrb[0].mxu0
        %v1843 = vpop.f32.mrb[0].mxu0
        %v1844 = vadd.f32 %v1732, %v1843
        %v1845 = vpop.f32.mrb[0].mxu0
        %1846 = vmatprep.mubr.bf16.mxu0 %v1236
        %1847 = vmatmul.mubr.bf16.gmra.mrb[0].mxu0 %v1235
        %v1848 = vpop.f32.mrb[0].mxu0
        %v1849 = vadd.f32 %v1737, %v1848
        %v1850 = vpop.f32.mrb[0].mxu0
        %v1851 = vpop.f32.mrb[0].mxu0
        %v1852 = vpop.f32.mrb[0].mxu0
        %1853 = vdwg.mxu0
        %1854 = vmatprep.subr.bf16.mxu0 0
        %1855 = vmatpush1.bf16.msra.mxu0 %v1566
        %1856 = vmatprep.subr.bf16.mxu0 0
        %1857 = vmatpush1.bf16.msra.mxu0 %v1567
        %1858 = vmatprep.subr.bf16.mxu0 0
        %1859 = vmatpush1.bf16.msra.mxu0 %v1568
        %1860 = vmatprep.subr.bf16.mxu0 0
        %1861 = vmatpush1.bf16.msra.mxu0 %v1569
        %1862 = vmatprep.subr.bf16.mxu0 0
        %1863 = vmatpush1.bf16.msra.mxu0 %v1570
        %1864 = vmatprep.subr.bf16.mxu0 0
        %1865 = vmatpush1.bf16.msra.mxu0 %v1571
        %1866 = vmatprep.subr.bf16.mxu0 0
        %1867 = vmatpush1.bf16.msra.mxu0 %v1572
        %1868 = vmatprep.subr.bf16.mxu0 0
        %1869 = vmatpush1.bf16.msra.mxu0 %v1573
        %1870 = vmatprep.subr.bf16.mxu0 0
        %1871 = vmatpush1.bf16.msra.mxu0 %v1574
        %1872 = vmatprep.subr.bf16.mxu0 0
        %1873 = vmatpush1.bf16.msra.mxu0 %v1575
        %1874 = vmatprep.subr.bf16.mxu0 0
        %1875 = vmatpush1.bf16.msra.mxu0 %v1576
        %1876 = vmatprep.subr.bf16.mxu0 0
        %1877 = vmatpush1.bf16.msra.mxu0 %v1577
        %1878 = vmatprep.subr.bf16.mxu0 0
        %1879 = vmatpush1.bf16.msra.mxu0 %v1578
        %1880 = vmatprep.subr.bf16.mxu0 0
        %1881 = vmatpush1.bf16.msra.mxu0 %v1579
        %1882 = vmatprep.subr.bf16.mxu0 0
        %1883 = vmatpush1.bf16.msra.mxu0 %v1580
        %1884 = vmatprep.subr.bf16.mxu0 0
        %1885 = vmatpush1.bf16.msra.mxu0 %v1581
        %1886 = vmatprep.mubr.bf16.mxu0 %v1184
        %1887 = vmatmul.mubr.bf16.gmra.mrb[0].mxu0 %v1183
        %v1888 = vpop.f32.mrb[0].mxu0
        %v1889 = vadd.f32 %v1777, %v1888
        %v1890 = vpop.f32.mrb[0].mxu0
        %v1891 = vpop.f32.mrb[0].mxu0
        %v1892 = vadd.f32 %v1780, %v1891
        %v1893 = vpop.f32.mrb[0].mxu0
        %1894 = vmatprep.mubr.bf16.mxu0 %v1190
        %1895 = vmatmul.mubr.bf16.gmra.mrb[0].mxu0 %v1189
        %v1896 = vpop.f32.mrb[0].mxu0
        %v1897 = vadd.f32 %v1785, %v1896
        %v1898 = vpop.f32.mrb[0].mxu0
        %v1899 = vpop.f32.mrb[0].mxu0
        %v1900 = vadd.f32 %v1788, %v1899
        %v1901 = vpop.f32.mrb[0].mxu0
        %1902 = vmatprep.mubr.bf16.mxu0 %v1196
        %1903 = vmatmul.mubr.bf16.gmra.mrb[0].mxu0 %v1195
        %v1904 = vpop.f32.mrb[0].mxu0
        %v1905 = vadd.f32 %v1793, %v1904
        %v1906 = vpop.f32.mrb[0].mxu0
        %v1907 = vpop.f32.mrb[0].mxu0
        %v1908 = vadd.f32 %v1796, %v1907
        %v1909 = vpop.f32.mrb[0].mxu0
        %1910 = vmatprep.mubr.bf16.mxu0 %v1202
        %1911 = vmatmul.mubr.bf16.gmra.mrb[0].mxu0 %v1201
        %v1912 = vpop.f32.mrb[0].mxu0
        %v1913 = vadd.f32 %v1801, %v1912
        %v1914 = vpop.f32.mrb[0].mxu0
        %v1915 = vpop.f32.mrb[0].mxu0
        %v1916 = vadd.f32 %v1804, %v1915
        %v1917 = vpop.f32.mrb[0].mxu0
        %1918 = vmatprep.mubr.bf16.mxu0 %v1208
        %1919 = vmatmul.mubr.bf16.gmra.mrb[0].mxu0 %v1207
        %v1920 = vpop.f32.mrb[0].mxu0
        %v1921 = vadd.f32 %v1809, %v1920
        %v1922 = vpop.f32.mrb[0].mxu0
        %v1923 = vpop.f32.mrb[0].mxu0
        %v1924 = vadd.f32 %v1812, %v1923
        %v1925 = vpop.f32.mrb[0].mxu0
        %1926 = vmatprep.mubr.bf16.mxu0 %v1214
        %1927 = vmatmul.mubr.bf16.gmra.mrb[0].mxu0 %v1213
        %v1928 = vpop.f32.mrb[0].mxu0
        %v1929 = vadd.f32 %v1817, %v1928
        %v1930 = vpop.f32.mrb[0].mxu0
        %v1931 = vpop.f32.mrb[0].mxu0
        %v1932 = vadd.f32 %v1820, %v1931
        %v1933 = vpop.f32.mrb[0].mxu0
        %1934 = vmatprep.mubr.bf16.mxu0 %v1220
        %1935 = vmatmul.mubr.bf16.gmra.mrb[0].mxu0 %v1219
        %v1936 = vpop.f32.mrb[0].mxu0
        %v1937 = vadd.f32 %v1825, %v1936
        %v1938 = vpop.f32.mrb[0].mxu0
        %v1939 = vpop.f32.mrb[0].mxu0
        %v1940 = vadd.f32 %v1828, %v1939
        %v1941 = vpop.f32.mrb[0].mxu0
        %1942 = vmatprep.mubr.bf16.mxu0 %v1226
        %1943 = vmatmul.mubr.bf16.gmra.mrb[0].mxu0 %v1225
        %v1944 = vpop.f32.mrb[0].mxu0
        %v1945 = vadd.f32 %v1833, %v1944
        %v1946 = vpop.f32.mrb[0].mxu0
        %v1947 = vpop.f32.mrb[0].mxu0
        %v1948 = vadd.f32 %v1836, %v1947
        %v1949 = vpop.f32.mrb[0].mxu0
        %1950 = vmatprep.mubr.bf16.mxu0 %v1232
        %1951 = vmatmul.mubr.bf16.gmra.mrb[0].mxu0 %v1231
        %v1952 = vpop.f32.mrb[0].mxu0
        %v1953 = vadd.f32 %v1841, %v1952
        %v1954 = vpop.f32.mrb[0].mxu0
        %v1955 = vpop.f32.mrb[0].mxu0
        %v1956 = vadd.f32 %v1844, %v1955
        %v1957 = vpop.f32.mrb[0].mxu0
        %1958 = vmatprep.mubr.bf16.mxu0 %v1238
        %1959 = vmatmul.mubr.bf16.gmra.mrb[0].mxu0 %v1237
        %v1960 = vpop.f32.mrb[0].mxu0
        %v1961 = vadd.f32 %v1849, %v1960
        %v1962 = vpop.f32.mrb[0].mxu0
        %v1963 = vpop.f32.mrb[0].mxu0
        %v1964 = vpop.f32.mrb[0].mxu0
        %1965 = vdwg.mxu0
        %1966 = vst [vmem:[%s271] sm:$0xff] %v1889
        %1967 = vst [vmem:[%s271 + $0x8] sm:$0xff] %v1892
        %1968 = vst [vmem:[%s271 + $0x10] sm:$0xff] %v1897
        %1969 = vst [vmem:[%s271 + $0x18] sm:$0xff] %v1900
        %1970 = vst [vmem:[%s271 + $0x20] sm:$0xff] %v1905
        %1971 = vst [vmem:[%s271 + $0x28] sm:$0xff] %v1908
        %1972 = vst [vmem:[%s271 + $0x30] sm:$0xff] %v1913
        %1973 = vst [vmem:[%s271 + $0x38] sm:$0xff] %v1916
        %1974 = vst [vmem:[%s271 + $0x40] sm:$0xff] %v1921
        %1975 = vst [vmem:[%s271 + $0x48] sm:$0xff] %v1924
        %1976 = vst [vmem:[%s271 + $0x50] sm:$0xff] %v1929
        %1977 = vst [vmem:[%s271 + $0x58] sm:$0xff] %v1932
        %1978 = vst [vmem:[%s271 + $0x60] sm:$0xff] %v1937
        %1979 = vst [vmem:[%s271 + $0x68] sm:$0xff] %v1940
        %1980 = vst [vmem:[%s271 + $0x70] sm:$0xff] %v1945
        %1981 = vst [vmem:[%s271 + $0x78] sm:$0xff] %v1948
        %1982 = vst [vmem:[%s271 + $0x80] sm:$0xff] %v1953
        %1983 = vst [vmem:[%s271 + $0x88] sm:$0xff] %v1956
        %1984 = vst [vmem:[%s271 + $0x90] sm:$0xff] %v1961
        %s1985 = sand.u32 %s141, 1
        %s1986 = scalar_lea.sflag [#allocation4], %s1985
        %s1987 = sand.u32 %s141, 1
        %s1988 = smul.addr %s1987, 152
        %s1989 = scalar_lea.vmem [#allocation8], %s1988
        // Predicated region
        $region53: #{tpu_custom_call.1} parent=39 // pred_check
          %p1990 = pneg %p151
        $region54: #{tpu_custom_call.1} parent=39 // pred_check_branch
          %1992 = sbr.rel (%p1990) target = $region56
        $region55: #{tpu_custom_call.1} parent=39 // pred_region
          %s1993 = smul.u32 19, %s23
          %s1995 = ssub.s32 2432, 2432
          %1996 = vsyncadd %s1986, %s1995
          %s1997 = smul.addr %s1993, 128
          %s1998 = scalar_lea.hbm %s5, %s1997
          %s1999 = sshll.u32 %s1989, 4
          %s2000 = int_to_ptr.vmem [resolvable:$true] %s1999
          %2005 = dma.vmem_to_hbm [thread:$0]  %s2000, 2432, %s1998, %s1986, 128, 128, 8
        $region56: #{tpu_custom_call.1} parent=39 // pred_fallthru
          _
      $region40: #{tpu_custom_call.1} parent=5 // pred_fallthru
        _
      %p2006 = scmp.le.s32.totalorder 2, %s18
      // Predicated region
      $region57: #{tpu_custom_call.1} parent=5 // pred_check
        %p2007 = pneg %p2006
      $region58: #{tpu_custom_call.1} parent=5 // pred_check_branch
        %2009 = sbr.rel (%p2007) target = $region60
      $region59: #{tpu_custom_call.1} parent=5 // pred_region
        %s2010 = ssub.s32 %s18, 2
        // Predicated region
        $region61: #{tpu_custom_call.1} parent=59 // pred_check
          %p2011 = pneg %p157
        $region62: #{tpu_custom_call.1} parent=59 // pred_check_branch
          %2013 = sbr.rel (%p2011) target = $region64
        $region63: #{tpu_custom_call.1} parent=59 // pred_region
          %s2014 = sand.u32 %s142, 1
          %s2015 = scalar_lea.sflag [#allocation4], %s2014
          %s2016 = sand.u32 %s142, 1
          %s2017 = smul.addr %s2016, 152
          %s2018 = scalar_lea.vmem [#allocation8], %s2017
          %2019 = dma.done %s2015, 2432
        $region64: #{tpu_custom_call.1} parent=59 // pred_fallthru
          _
      $region60: #{tpu_custom_call.1} parent=5 // pred_fallthru
        _
    $region6: #{tpu_custom_call.1} parent=1 // loop_footer
      %s22 = sadd.s32 1, %s18
    $region7: #{tpu_custom_call.1} parent=1 // loop_footer_branch
      %17 = sbr.rel target = $region3
    $region8: #{tpu_custom_call.1} parent=1 // loop_exit
      _
    %2020 = vsyncpa [#allocation3], 1
    %s2021 = scalar_lea.sflag [#allocation3], 1
    %2022 = vsyncpa %s2021, 1
    %2023 = vsyncpa [#allocation6], 1
    %2024 = vsyncpa [#allocation4], 1
    %s2025 = scalar_lea.sflag [#allocation4], 1
    %2026 = vsyncpa %s2025, 1

</llo_original>
